<compile_context>
chip_gen: v6e
topology: v6e:2x2x1
jax: 0.10.0
libtpu: 0.0.40
codegen_flags: <defaults>
</compile_context>

<pallas_src>
import functools

import jax
import jax.numpy as jnp
from jax import lax
from jax.experimental import pallas as pl
from jax.experimental.pallas import tpu as pltpu


def _round_up(x, m):
    return (x + m - 1) // m * m


# --------------------------------------------------------------------------
# Kernel
# --------------------------------------------------------------------------
def _lstm_classifier_kernel(xp_ref,       # (Tc, Bb, G) f32: x @ W_ih + b, time-major
                            whh_ref,      # (Hg, G)     matmul dtype, gates [i,f,o,g]
                            fc1w_ref,     # (Hg, F1p)   matmul dtype
                            fc1b_ref,     # (1, F1p)    f32
                            fc2w_ref,     # (F1p, Cp)   matmul dtype
                            fc2b_ref,     # (1, Cp)     f32
                            out_ref,      # (Bb, Cp)    f32
                            h_scr,        # (Bb, Hg)    f32, persists across time grid
                            c_scr,        # (Bb, Hg)    f32, persists across time grid
                            *, unroll):
    t = pl.program_id(1)
    n_t = pl.num_programs(1)
    Tc = xp_ref.shape[0]
    Hg = h_scr.shape[1]
    w_dt = whh_ref.dtype

    @pl.when(t == 0)
    def _():
        h_scr[...] = jnp.zeros_like(h_scr)
        c_scr[...] = jnp.zeros_like(c_scr)

    # Serial recurrence: only the small (Bb,Hg)@(Hg,G) matmul + gate math per step.
    def step(k, carry):
        pre = xp_ref[k] + jnp.dot(h_scr[...].astype(w_dt), whh_ref[...],
                                  preferred_element_type=jnp.float32)     # (Bb, G)
        # Gate layout [i | f | o | g], each Hg lanes, packed contiguously.
        # One tanh-based sigmoid covers the contiguous [0, 3*Hg) slice.
        sig = 0.5 * jnp.tanh(0.5 * pre[:, :3 * Hg]) + 0.5
        i_g = sig[:, 0 * Hg:1 * Hg]
        f_g = sig[:, 1 * Hg:2 * Hg]
        o_g = sig[:, 2 * Hg:3 * Hg]
        g_g = jnp.tanh(pre[:, 3 * Hg:4 * Hg])
        c_new = f_g * c_scr[...] + i_g * g_g
        c_scr[...] = c_new
        h_scr[...] = o_g * jnp.tanh(c_new)
        return carry

    lax.fori_loop(0, Tc, step, 0, unroll=unroll)

    # MLP head on the final hidden state (last time chunk only).
    @pl.when(t == n_t - 1)
    def _():
        z = jnp.maximum(h_scr[...], 0.0)
        z = jnp.dot(z.astype(w_dt), fc1w_ref[...],
                    preferred_element_type=jnp.float32) + fc1b_ref[...]
        z = jnp.maximum(z, 0.0)
        out_ref[...] = jnp.dot(z.astype(w_dt), fc2w_ref[...],
                               preferred_element_type=jnp.float32) + fc2b_ref[...]


# --------------------------------------------------------------------------
# Wrapper
# --------------------------------------------------------------------------
def lstm_classifier_forward(x, params, num_classes, *, chunk=64, batch_block=256):
    """x: (B, T, I) float32.  Returns logits (B, num_classes) float32."""
    B, T, I = x.shape
    Hg, G = params["whh_t"].shape
    F1p = params["fc1w_t"].shape[1]
    Cp = params["fc2w_t"].shape[1]
    w_dt = params["whh_t"].dtype

    # Time chunk: largest divisor of T not exceeding `chunk` -> no masking and no
    # wasted padded steps on the final chunk.
    Tc = max(d for d in range(1, min(chunk, T) + 1) if T % d == 0)
    n_chunks = T // Tc
    unroll = True if Tc <= 16 else 8

    # Batch blocking (sublane-aligned); >1 block lets v7x split across its 2 TCs.
    Bb = min(_round_up(max(B, 8), 8), _round_up(batch_block, 8))
    Bp = _round_up(max(B, 8), Bb)
    n_bblocks = Bp // Bb

    # Input projection + bias as one fused lane-dense XLA GEMM (bf16 operands,
    # f32 accumulate); go time-major and zero-pad the batch.  Padded batch rows
    # stay zero through the recurrence and are sliced off at the end.
    xp = jnp.dot(x.reshape(B * T, I).astype(w_dt), params["wih_t"],
                 preferred_element_type=jnp.float32) + params["b"]
    xp = xp.reshape(B, T, G)
    xp_p = jnp.zeros((T, Bp, G), jnp.float32).at[:, :B].set(
        jnp.transpose(xp, (1, 0, 2)))

    # VMEM budget from actual block sizes (weights/xp are double-buffered).
    wbytes = jnp.dtype(w_dt).itemsize
    vmem_est = (2 * Tc * Bb * G * 4
                + 2 * (Hg * G + Hg * F1p + F1p * Cp) * wbytes
                + 2 * (F1p + Cp) * 4
                + 2 * Bb * Cp * 4
                + 2 * Bb * Hg * 4)
    vmem_limit = int(min(max(2 * vmem_est, 8 * 1024 * 1024), 48 * 1024 * 1024))

    kernel = functools.partial(_lstm_classifier_kernel, unroll=unroll)

    out_padded = pl.pallas_call(
        kernel,
        out_shape=jax.ShapeDtypeStruct((Bp, Cp), jnp.float32),
        grid_spec=pltpu.PrefetchScalarGridSpec(
            num_scalar_prefetch=0,
            grid=(n_bblocks, n_chunks),
            in_specs=[
                pl.BlockSpec((Tc, Bb, G), lambda b, t: (t, b, 0)),   # xp: pipelined
                pl.BlockSpec((Hg, G), lambda b, t: (0, 0)),          # weights stay
                pl.BlockSpec((Hg, F1p), lambda b, t: (0, 0)),        # resident
                pl.BlockSpec((1, F1p), lambda b, t: (0, 0)),
                pl.BlockSpec((F1p, Cp), lambda b, t: (0, 0)),
                pl.BlockSpec((1, Cp), lambda b, t: (0, 0)),
            ],
            out_specs=pl.BlockSpec((Bb, Cp), lambda b, t: (b, 0)),
            scratch_shapes=[
                pltpu.VMEM((Bb, Hg), jnp.float32),   # h carry
                pltpu.VMEM((Bb, Hg), jnp.float32),   # c carry
            ],
        ),
        compiler_params=pltpu.CompilerParams(
            dimension_semantics=("parallel", "arbitrary"),  # batch ∥, time carries h/c
            vmem_limit_bytes=vmem_limit,
        ),
    )(xp_p,
      params["whh_t"],
      params["fc1w_t"], params["fc1b"],
      params["fc2w_t"], params["fc2b"])

    return out_padded[:B, :num_classes]


# --------------------------------------------------------------------------
# Parameters
# --------------------------------------------------------------------------
def init_raw_params(key, input_size, hidden_size, num_classes):
    """PyTorch-layout parameters (uniform init like nn.LSTM / nn.Linear)."""
    ks = jax.random.split(key, 8)
    H, I, C = hidden_size, input_size, num_classes
    s = 1.0 / jnp.sqrt(H)
    raw = {
        "w_ih": jax.random.uniform(ks[0], (4 * H, I), jnp.float32, -s, s),
        "w_hh": jax.random.uniform(ks[1], (4 * H, H), jnp.float32, -s, s),
        "b_ih": jax.random.uniform(ks[2], (4 * H,), jnp.float32, -s, s),
        "b_hh": jax.random.uniform(ks[3], (4 * H,), jnp.float32, -s, s),
        "fc1_w": jax.random.uniform(ks[4], (64, H), jnp.float32, -s, s),
        "fc1_b": jax.random.uniform(ks[5], (64,), jnp.float32, -s, s),
    }
    s2 = 1.0 / jnp.sqrt(64.0)
    raw["fc2_w"] = jax.random.uniform(ks[6], (C, 64), jnp.float32, -s2, s2)
    raw["fc2_b"] = jax.random.uniform(ks[7], (C,), jnp.float32, -s2, s2)
    return raw


def prepare_params(raw, input_size, hidden_size, num_classes,
                   matmul_dtype=jnp.bfloat16):
    """Transpose; reorder gates [i,f,g,o]->[i,f,o,g]; pack gates contiguously at
    stride Hg=round_up(H,8) and pad only the total 4*Hg to a 128-lane multiple;
    cast matmul operands to `matmul_dtype` (biases stay f32)."""
    H, I, C = hidden_size, input_size, num_classes
    Hg = _round_up(H, 8)
    G = _round_up(4 * Hg, 128)
    F1 = raw["fc1_w"].shape[0]
    F1p = _round_up(F1, 128)
    Cp = _round_up(C, 128)

    def regate(w):  # rows (4H, ...) in PyTorch order i,f,g,o -> (G, ...) order i,f,o,g
        i, f, g, o = w[0:H], w[H:2 * H], w[2 * H:3 * H], w[3 * H:4 * H]
        out = jnp.zeros((G,) + w.shape[1:], jnp.float32)
        for idx, blk in enumerate((i, f, o, g)):
            out = out.at[idx * Hg: idx * Hg + H].set(blk)
        return out

    wih_g = regate(raw["w_ih"])                                   # (G, I)
    whh_g = regate(raw["w_hh"])                                    # (G, H)
    b_g = regate((raw["b_ih"] + raw["b_hh"])[:, None])[:, 0]       # (G,)

    whh_t = jnp.zeros((Hg, G), jnp.float32).at[:H].set(whh_g.T)
    fc1w_t = jnp.zeros((Hg, F1p), jnp.float32).at[:H, :F1].set(raw["fc1_w"].T)
    fc1b = jnp.zeros((1, F1p), jnp.float32).at[0, :F1].set(raw["fc1_b"])
    fc2w_t = jnp.zeros((F1p, Cp), jnp.float32).at[:F1, :C].set(raw["fc2_w"].T)
    fc2b = jnp.zeros((1, Cp), jnp.float32).at[0, :C].set(raw["fc2_b"])

    return {
        "wih_t": wih_g.T.astype(matmul_dtype),     # (I, G), used by wrapper GEMM
        "b": b_g.reshape(1, G),                    # (1, G) f32, folded into xp
        "whh_t": whh_t.astype(matmul_dtype),       # (Hg, G)
        "fc1w_t": fc1w_t.astype(matmul_dtype),     # (Hg, F1p)
        "fc1b": fc1b,
        "fc2w_t": fc2w_t.astype(matmul_dtype),     # (F1p, Cp)
        "fc2b": fc2b,
    }


# --------------------------------------------------------------------------
# Pure-JAX reference (PyTorch semantics, unpadded weights, f32)
# --------------------------------------------------------------------------
def reference_forward(x, raw):
    B, T, I = x.shape
    H = raw["w_hh"].shape[1]
    w_ih_t, w_hh_t = raw["w_ih"].T, raw["w_hh"].T
    b = (raw["b_ih"] + raw["b_hh"]).reshape(1, -1)
    h = jnp.zeros((B, H), jnp.float32)
    c = jnp.zeros((B, H), jnp.float32)
    for t in range(T):
        gates = x[:, t, :] @ w_ih_t + h @ w_hh_t + b
        i_g = jax.nn.sigmoid(gates[:, 0 * H:1 * H])
        f_g = jax.nn.sigmoid(gates[:, 1 * H:2 * H])
        g_g = jnp.tanh(gates[:, 2 * H:3 * H])
        o_g = jax.nn.sigmoid(gates[:, 3 * H:4 * H])
        c = f_g * c + i_g * g_g
        h = o_g * jnp.tanh(c)
    z = jnp.maximum(h, 0.0) @ raw["fc1_w"].T + raw["fc1_b"]
    z = jnp.maximum(z, 0.0) @ raw["fc2_w"].T + raw["fc2_b"]
    return z


if __name__ == "__main__":
    B, T, I, H, C = 2, 8, 16, 32, 10

    key = jax.random.PRNGKey(0)
    kx, kp = jax.random.split(key)
    x = jax.random.normal(kx, (B, T, I), jnp.float32)

    raw = init_raw_params(kp, I, H, C)
    ref = reference_forward(x, raw)

    # Exact path (f32 matmul operands) — verifies structure / gate packing.
    params_f32 = prepare_params(raw, I, H, C, matmul_dtype=jnp.float32)
    out_f32 = jax.block_until_ready(lstm_classifier_forward(x, params_f32, C))
    assert out_f32.shape == (B, C)
    assert jnp.allclose(out_f32, ref, atol=1e-4, rtol=1e-4), (out_f32, ref)

    # Performance path (bf16 matmul operands, f32 accumulation + gate math).
    params_bf16 = prepare_params(raw, I, H, C, matmul_dtype=jnp.bfloat16)
    out_bf16 = jax.block_until_ready(lstm_classifier_forward(x, params_bf16, C))
    assert out_bf16.shape == (B, C)
    assert jnp.allclose(out_bf16, ref, atol=5e-2, rtol=5e-2), (out_bf16, ref)

    print("KERNEL_OK")
</pallas_src>

<mosaic_0001>
module attributes {stable_mosaic.version = 11 : i64} {
  func.func @_lstm_classifier_kernel(%arg0: i32, %arg1: i32, %arg2: memref<8x8x128xf32, #tpu.memory_space<vmem>>, %arg3: memref<32x128xf32, #tpu.memory_space<vmem>>, %arg4: memref<32x128xf32, #tpu.memory_space<vmem>>, %arg5: memref<1x128xf32, #tpu.memory_space<vmem>>, %arg6: memref<128x128xf32, #tpu.memory_space<vmem>>, %arg7: memref<1x128xf32, #tpu.memory_space<vmem>>, %arg8: memref<8x128xf32, #tpu.memory_space<vmem>>, %arg9: memref<8x32xf32, #tpu.memory_space<vmem>>, %arg10: memref<8x32xf32, #tpu.memory_space<vmem>>) attributes {dimension_semantics = [#tpu.dimension_semantics<parallel>, #tpu.dimension_semantics<arbitrary>], iteration_bounds = array<i64: 1, 1>, scalar_prefetch = 0 : i64, scratch_operands = 2 : i64, tpu.core_type = #tpu.core_type<tc>, window_params = [{transform_indices = @transform_0, window_bounds = array<i64: 8, 8, 128>}, {pipeline_mode = #tpu.pipeline_mode<synchronous>, transform_indices = @transform_1, window_bounds = array<i64: 32, 128>}, {pipeline_mode = #tpu.pipeline_mode<synchronous>, transform_indices = @transform_2, window_bounds = array<i64: 32, 128>}, {pipeline_mode = #tpu.pipeline_mode<synchronous>, transform_indices = @transform_3, window_bounds = array<i64: 1, 128>}, {pipeline_mode = #tpu.pipeline_mode<synchronous>, transform_indices = @transform_4, window_bounds = array<i64: 128, 128>}, {pipeline_mode = #tpu.pipeline_mode<synchronous>, transform_indices = @transform_5, window_bounds = array<i64: 1, 128>}, {transform_indices = @transform_6, window_bounds = array<i64: 8, 128>}]} {
    %c0_i32 = arith.constant 0 : i32
    %0 = arith.cmpi eq, %arg1, %c0_i32 : i32
    %1 = arith.extui %0 : i1 to i32
    %c0_i32_0 = arith.constant 0 : i32
    %2 = arith.cmpi ne, %1, %c0_i32_0 : i32
    scf.if %2 {
      %cst_130 = arith.constant 0.000000e+00 : f32
      %230 = vector.broadcast %cst_130 : f32 to vector<8x32xf32>
      %c0_131 = arith.constant 0 : index
      %c0_132 = arith.constant 0 : index
      %231 = vector.load %arg9[%c0_131, %c0_132] : memref<8x32xf32, #tpu.memory_space<vmem>>, vector<8x32xf32>
      tpu.vector_store %arg9[%c0_131, %c0_132], %230 {strides = array<i32>} : memref<8x32xf32, #tpu.memory_space<vmem>>, vector<8x32xf32>,
      %cst_133 = arith.constant 0.000000e+00 : f32
      %232 = vector.broadcast %cst_133 : f32 to vector<8x32xf32>
      %c0_134 = arith.constant 0 : index
      %c0_135 = arith.constant 0 : index
      %233 = vector.load %arg10[%c0_134, %c0_135] : memref<8x32xf32, #tpu.memory_space<vmem>>, vector<8x32xf32>
      tpu.vector_store %arg10[%c0_134, %c0_135], %232 {strides = array<i32>} : memref<8x32xf32, #tpu.memory_space<vmem>>, vector<8x32xf32>,
    } else {
    }
    %c0_i32_1 = arith.constant 0 : i32
    %3 = arith.index_cast %c0_i32_1 : i32 to index
    %c0 = arith.constant 0 : index
    %c0_2 = arith.constant 0 : index
    %4 = vector.load %arg2[%3, %c0, %c0_2] : memref<8x8x128xf32, #tpu.memory_space<vmem>>, vector<1x8x128xf32>
    %5 = vector.shape_cast %4 : vector<1x8x128xf32> to vector<8x128xf32>
    %c0_3 = arith.constant 0 : index
    %c0_4 = arith.constant 0 : index
    %6 = vector.load %arg9[%c0_3, %c0_4] : memref<8x32xf32, #tpu.memory_space<vmem>>, vector<8x32xf32>
    %c0_5 = arith.constant 0 : index
    %c0_6 = arith.constant 0 : index
    %7 = vector.load %arg3[%c0_5, %c0_6] : memref<32x128xf32, #tpu.memory_space<vmem>>, vector<32x128xf32>
    %cst = arith.constant dense<0.000000e+00> : vector<8x128xf32>
    %8 = tpu.matmul %6, %7, %cst {dimension_numbers = #tpu.dot_dimension_numbers<[1], [0], [0], [1], [0, 0, 1, 1], [], []>} : vector<8x32xf32>, vector<32x128xf32>, vector<8x128xf32> -> vector<8x128xf32>
    %9 = arith.addf %5, %8 : vector<8x128xf32>
    %10 = vector.extract_strided_slice %9 {offsets = [0, 0], sizes = [8, 96], strides = [1, 1]} : vector<8x128xf32> to vector<8x96xf32>
    %cst_7 = arith.constant 5.000000e-01 : f32
    %11 = vector.broadcast %cst_7 : f32 to vector<8x96xf32>
    %12 = arith.mulf %11, %10 : vector<8x96xf32>
    %13 = math.tanh %12 : vector<8x96xf32>
    %cst_8 = arith.constant 5.000000e-01 : f32
    %14 = vector.broadcast %cst_8 : f32 to vector<8x96xf32>
    %15 = arith.mulf %14, %13 : vector<8x96xf32>
    %cst_9 = arith.constant 5.000000e-01 : f32
    %16 = vector.broadcast %cst_9 : f32 to vector<8x96xf32>
    %17 = arith.addf %15, %16 : vector<8x96xf32>
    %18 = vector.extract_strided_slice %17 {offsets = [0, 0], sizes = [8, 32], strides = [1, 1]} : vector<8x96xf32> to vector<8x32xf32>
    %19 = vector.extract_strided_slice %17 {offsets = [0, 32], sizes = [8, 32], strides = [1, 1]} : vector<8x96xf32> to vector<8x32xf32>
    %20 = vector.extract_strided_slice %17 {offsets = [0, 64], sizes = [8, 32], strides = [1, 1]} : vector<8x96xf32> to vector<8x32xf32>
    %21 = vector.extract_strided_slice %9 {offsets = [0, 96], sizes = [8, 32], strides = [1, 1]} : vector<8x128xf32> to vector<8x32xf32>
    %22 = math.tanh %21 : vector<8x32xf32>
    %c0_10 = arith.constant 0 : index
    %c0_11 = arith.constant 0 : index
    %23 = vector.load %arg10[%c0_10, %c0_11] : memref<8x32xf32, #tpu.memory_space<vmem>>, vector<8x32xf32>
    %24 = arith.mulf %19, %23 : vector<8x32xf32>
    %25 = arith.mulf %18, %22 : vector<8x32xf32>
    %26 = arith.addf %24, %25 : vector<8x32xf32>
    %c0_12 = arith.constant 0 : index
    %c0_13 = arith.constant 0 : index
    %27 = vector.load %arg10[%c0_12, %c0_13] : memref<8x32xf32, #tpu.memory_space<vmem>>, vector<8x32xf32>
    tpu.vector_store %arg10[%c0_12, %c0_13], %26 {strides = array<i32>} : memref<8x32xf32, #tpu.memory_space<vmem>>, vector<8x32xf32>,
    %28 = math.tanh %26 : vector<8x32xf32>
    %29 = arith.mulf %20, %28 : vector<8x32xf32>
    %c0_14 = arith.constant 0 : index
    %c0_15 = arith.constant 0 : index
    %30 = vector.load %arg9[%c0_14, %c0_15] : memref<8x32xf32, #tpu.memory_space<vmem>>, vector<8x32xf32>
    tpu.vector_store %arg9[%c0_14, %c0_15], %29 {strides = array<i32>} : memref<8x32xf32, #tpu.memory_space<vmem>>, vector<8x32xf32>,
    %c1_i32 = arith.constant 1 : i32
    %31 = arith.index_cast %c1_i32 : i32 to index
    %c0_16 = arith.constant 0 : index
    %c0_17 = arith.constant 0 : index
    %32 = vector.load %arg2[%31, %c0_16, %c0_17] : memref<8x8x128xf32, #tpu.memory_space<vmem>>, vector<1x8x128xf32>
    %33 = vector.shape_cast %32 : vector<1x8x128xf32> to vector<8x128xf32>
    %c0_18 = arith.constant 0 : index
    %c0_19 = arith.constant 0 : index
    %34 = vector.load %arg9[%c0_18, %c0_19] : memref<8x32xf32, #tpu.memory_space<vmem>>, vector<8x32xf32>
    %c0_20 = arith.constant 0 : index
    %c0_21 = arith.constant 0 : index
    %35 = vector.load %arg3[%c0_20, %c0_21] : memref<32x128xf32, #tpu.memory_space<vmem>>, vector<32x128xf32>
    %cst_22 = arith.constant dense<0.000000e+00> : vector<8x128xf32>
    %36 = tpu.matmul %34, %35, %cst_22 {dimension_numbers = #tpu.dot_dimension_numbers<[1], [0], [0], [1], [0, 0, 1, 1], [], []>} : vector<8x32xf32>, vector<32x128xf32>, vector<8x128xf32> -> vector<8x128xf32>
    %37 = arith.addf %33, %36 : vector<8x128xf32>
    %38 = vector.extract_strided_slice %37 {offsets = [0, 0], sizes = [8, 96], strides = [1, 1]} : vector<8x128xf32> to vector<8x96xf32>
    %cst_23 = arith.constant 5.000000e-01 : f32
    %39 = vector.broadcast %cst_23 : f32 to vector<8x96xf32>
    %40 = arith.mulf %39, %38 : vector<8x96xf32>
    %41 = math.tanh %40 : vector<8x96xf32>
    %cst_24 = arith.constant 5.000000e-01 : f32
    %42 = vector.broadcast %cst_24 : f32 to vector<8x96xf32>
    %43 = arith.mulf %42, %41 : vector<8x96xf32>
    %cst_25 = arith.constant 5.000000e-01 : f32
    %44 = vector.broadcast %cst_25 : f32 to vector<8x96xf32>
    %45 = arith.addf %43, %44 : vector<8x96xf32>
    %46 = vector.extract_strided_slice %45 {offsets = [0, 0], sizes = [8, 32], strides = [1, 1]} : vector<8x96xf32> to vector<8x32xf32>
    %47 = vector.extract_strided_slice %45 {offsets = [0, 32], sizes = [8, 32], strides = [1, 1]} : vector<8x96xf32> to vector<8x32xf32>
    %48 = vector.extract_strided_slice %45 {offsets = [0, 64], sizes = [8, 32], strides = [1, 1]} : vector<8x96xf32> to vector<8x32xf32>
    %49 = vector.extract_strided_slice %37 {offsets = [0, 96], sizes = [8, 32], strides = [1, 1]} : vector<8x128xf32> to vector<8x32xf32>
    %50 = math.tanh %49 : vector<8x32xf32>
    %c0_26 = arith.constant 0 : index
    %c0_27 = arith.constant 0 : index
    %51 = vector.load %arg10[%c0_26, %c0_27] : memref<8x32xf32, #tpu.memory_space<vmem>>, vector<8x32xf32>
    %52 = arith.mulf %47, %51 : vector<8x32xf32>
    %53 = arith.mulf %46, %50 : vector<8x32xf32>
    %54 = arith.addf %52, %53 : vector<8x32xf32>
    %c0_28 = arith.constant 0 : index
    %c0_29 = arith.constant 0 : index
    %55 = vector.load %arg10[%c0_28, %c0_29] : memref<8x32xf32, #tpu.memory_space<vmem>>, vector<8x32xf32>
    tpu.vector_store %arg10[%c0_28, %c0_29], %54 {strides = array<i32>} : memref<8x32xf32, #tpu.memory_space<vmem>>, vector<8x32xf32>,
    %56 = math.tanh %54 : vector<8x32xf32>
    %57 = arith.mulf %48, %56 : vector<8x32xf32>
    %c0_30 = arith.constant 0 : index
    %c0_31 = arith.constant 0 : index
    %58 = vector.load %arg9[%c0_30, %c0_31] : memref<8x32xf32, #tpu.memory_space<vmem>>, vector<8x32xf32>
    tpu.vector_store %arg9[%c0_30, %c0_31], %57 {strides = array<i32>} : memref<8x32xf32, #tpu.memory_space<vmem>>, vector<8x32xf32>,
    %c2_i32 = arith.constant 2 : i32
    %59 = arith.index_cast %c2_i32 : i32 to index
    %c0_32 = arith.constant 0 : index
    %c0_33 = arith.constant 0 : index
    %60 = vector.load %arg2[%59, %c0_32, %c0_33] : memref<8x8x128xf32, #tpu.memory_space<vmem>>, vector<1x8x128xf32>
    %61 = vector.shape_cast %60 : vector<1x8x128xf32> to vector<8x128xf32>
    %c0_34 = arith.constant 0 : index
    %c0_35 = arith.constant 0 : index
    %62 = vector.load %arg9[%c0_34, %c0_35] : memref<8x32xf32, #tpu.memory_space<vmem>>, vector<8x32xf32>
    %c0_36 = arith.constant 0 : index
    %c0_37 = arith.constant 0 : index
    %63 = vector.load %arg3[%c0_36, %c0_37] : memref<32x128xf32, #tpu.memory_space<vmem>>, vector<32x128xf32>
    %cst_38 = arith.constant dense<0.000000e+00> : vector<8x128xf32>
    %64 = tpu.matmul %62, %63, %cst_38 {dimension_numbers = #tpu.dot_dimension_numbers<[1], [0], [0], [1], [0, 0, 1, 1], [], []>} : vector<8x32xf32>, vector<32x128xf32>, vector<8x128xf32> -> vector<8x128xf32>
    %65 = arith.addf %61, %64 : vector<8x128xf32>
    %66 = vector.extract_strided_slice %65 {offsets = [0, 0], sizes = [8, 96], strides = [1, 1]} : vector<8x128xf32> to vector<8x96xf32>
    %cst_39 = arith.constant 5.000000e-01 : f32
    %67 = vector.broadcast %cst_39 : f32 to vector<8x96xf32>
    %68 = arith.mulf %67, %66 : vector<8x96xf32>
    %69 = math.tanh %68 : vector<8x96xf32>
    %cst_40 = arith.constant 5.000000e-01 : f32
    %70 = vector.broadcast %cst_40 : f32 to vector<8x96xf32>
    %71 = arith.mulf %70, %69 : vector<8x96xf32>
    %cst_41 = arith.constant 5.000000e-01 : f32
    %72 = vector.broadcast %cst_41 : f32 to vector<8x96xf32>
    %73 = arith.addf %71, %72 : vector<8x96xf32>
    %74 = vector.extract_strided_slice %73 {offsets = [0, 0], sizes = [8, 32], strides = [1, 1]} : vector<8x96xf32> to vector<8x32xf32>
    %75 = vector.extract_strided_slice %73 {offsets = [0, 32], sizes = [8, 32], strides = [1, 1]} : vector<8x96xf32> to vector<8x32xf32>
    %76 = vector.extract_strided_slice %73 {offsets = [0, 64], sizes = [8, 32], strides = [1, 1]} : vector<8x96xf32> to vector<8x32xf32>
    %77 = vector.extract_strided_slice %65 {offsets = [0, 96], sizes = [8, 32], strides = [1, 1]} : vector<8x128xf32> to vector<8x32xf32>
    %78 = math.tanh %77 : vector<8x32xf32>
    %c0_42 = arith.constant 0 : index
    %c0_43 = arith.constant 0 : index
    %79 = vector.load %arg10[%c0_42, %c0_43] : memref<8x32xf32, #tpu.memory_space<vmem>>, vector<8x32xf32>
    %80 = arith.mulf %75, %79 : vector<8x32xf32>
    %81 = arith.mulf %74, %78 : vector<8x32xf32>
    %82 = arith.addf %80, %81 : vector<8x32xf32>
    %c0_44 = arith.constant 0 : index
    %c0_45 = arith.constant 0 : index
    %83 = vector.load %arg10[%c0_44, %c0_45] : memref<8x32xf32, #tpu.memory_space<vmem>>, vector<8x32xf32>
    tpu.vector_store %arg10[%c0_44, %c0_45], %82 {strides = array<i32>} : memref<8x32xf32, #tpu.memory_space<vmem>>, vector<8x32xf32>,
    %84 = math.tanh %82 : vector<8x32xf32>
    %85 = arith.mulf %76, %84 : vector<8x32xf32>
    %c0_46 = arith.constant 0 : index
    %c0_47 = arith.constant 0 : index
    %86 = vector.load %arg9[%c0_46, %c0_47] : memref<8x32xf32, #tpu.memory_space<vmem>>, vector<8x32xf32>
    tpu.vector_store %arg9[%c0_46, %c0_47], %85 {strides = array<i32>} : memref<8x32xf32, #tpu.memory_space<vmem>>, vector<8x32xf32>,
    %c3_i32 = arith.constant 3 : i32
    %87 = arith.index_cast %c3_i32 : i32 to index
    %c0_48 = arith.constant 0 : index
    %c0_49 = arith.constant 0 : index
    %88 = vector.load %arg2[%87, %c0_48, %c0_49] : memref<8x8x128xf32, #tpu.memory_space<vmem>>, vector<1x8x128xf32>
    %89 = vector.shape_cast %88 : vector<1x8x128xf32> to vector<8x128xf32>
    %c0_50 = arith.constant 0 : index
    %c0_51 = arith.constant 0 : index
    %90 = vector.load %arg9[%c0_50, %c0_51] : memref<8x32xf32, #tpu.memory_space<vmem>>, vector<8x32xf32>
    %c0_52 = arith.constant 0 : index
    %c0_53 = arith.constant 0 : index
    %91 = vector.load %arg3[%c0_52, %c0_53] : memref<32x128xf32, #tpu.memory_space<vmem>>, vector<32x128xf32>
    %cst_54 = arith.constant dense<0.000000e+00> : vector<8x128xf32>
    %92 = tpu.matmul %90, %91, %cst_54 {dimension_numbers = #tpu.dot_dimension_numbers<[1], [0], [0], [1], [0, 0, 1, 1], [], []>} : vector<8x32xf32>, vector<32x128xf32>, vector<8x128xf32> -> vector<8x128xf32>
    %93 = arith.addf %89, %92 : vector<8x128xf32>
    %94 = vector.extract_strided_slice %93 {offsets = [0, 0], sizes = [8, 96], strides = [1, 1]} : vector<8x128xf32> to vector<8x96xf32>
    %cst_55 = arith.constant 5.000000e-01 : f32
    %95 = vector.broadcast %cst_55 : f32 to vector<8x96xf32>
    %96 = arith.mulf %95, %94 : vector<8x96xf32>
    %97 = math.tanh %96 : vector<8x96xf32>
    %cst_56 = arith.constant 5.000000e-01 : f32
    %98 = vector.broadcast %cst_56 : f32 to vector<8x96xf32>
    %99 = arith.mulf %98, %97 : vector<8x96xf32>
    %cst_57 = arith.constant 5.000000e-01 : f32
    %100 = vector.broadcast %cst_57 : f32 to vector<8x96xf32>
    %101 = arith.addf %99, %100 : vector<8x96xf32>
    %102 = vector.extract_strided_slice %101 {offsets = [0, 0], sizes = [8, 32], strides = [1, 1]} : vector<8x96xf32> to vector<8x32xf32>
    %103 = vector.extract_strided_slice %101 {offsets = [0, 32], sizes = [8, 32], strides = [1, 1]} : vector<8x96xf32> to vector<8x32xf32>
    %104 = vector.extract_strided_slice %101 {offsets = [0, 64], sizes = [8, 32], strides = [1, 1]} : vector<8x96xf32> to vector<8x32xf32>
    %105 = vector.extract_strided_slice %93 {offsets = [0, 96], sizes = [8, 32], strides = [1, 1]} : vector<8x128xf32> to vector<8x32xf32>
    %106 = math.tanh %105 : vector<8x32xf32>
    %c0_58 = arith.constant 0 : index
    %c0_59 = arith.constant 0 : index
    %107 = vector.load %arg10[%c0_58, %c0_59] : memref<8x32xf32, #tpu.memory_space<vmem>>, vector<8x32xf32>
    %108 = arith.mulf %103, %107 : vector<8x32xf32>
    %109 = arith.mulf %102, %106 : vector<8x32xf32>
    %110 = arith.addf %108, %109 : vector<8x32xf32>
    %c0_60 = arith.constant 0 : index
    %c0_61 = arith.constant 0 : index
    %111 = vector.load %arg10[%c0_60, %c0_61] : memref<8x32xf32, #tpu.memory_space<vmem>>, vector<8x32xf32>
    tpu.vector_store %arg10[%c0_60, %c0_61], %110 {strides = array<i32>} : memref<8x32xf32, #tpu.memory_space<vmem>>, vector<8x32xf32>,
    %112 = math.tanh %110 : vector<8x32xf32>
    %113 = arith.mulf %104, %112 : vector<8x32xf32>
    %c0_62 = arith.constant 0 : index
    %c0_63 = arith.constant 0 : index
    %114 = vector.load %arg9[%c0_62, %c0_63] : memref<8x32xf32, #tpu.memory_space<vmem>>, vector<8x32xf32>
    tpu.vector_store %arg9[%c0_62, %c0_63], %113 {strides = array<i32>} : memref<8x32xf32, #tpu.memory_space<vmem>>, vector<8x32xf32>,
    %c4_i32 = arith.constant 4 : i32
    %115 = arith.index_cast %c4_i32 : i32 to index
    %c0_64 = arith.constant 0 : index
    %c0_65 = arith.constant 0 : index
    %116 = vector.load %arg2[%115, %c0_64, %c0_65] : memref<8x8x128xf32, #tpu.memory_space<vmem>>, vector<1x8x128xf32>
    %117 = vector.shape_cast %116 : vector<1x8x128xf32> to vector<8x128xf32>
    %c0_66 = arith.constant 0 : index
    %c0_67 = arith.constant 0 : index
    %118 = vector.load %arg9[%c0_66, %c0_67] : memref<8x32xf32, #tpu.memory_space<vmem>>, vector<8x32xf32>
    %c0_68 = arith.constant 0 : index
    %c0_69 = arith.constant 0 : index
    %119 = vector.load %arg3[%c0_68, %c0_69] : memref<32x128xf32, #tpu.memory_space<vmem>>, vector<32x128xf32>
    %cst_70 = arith.constant dense<0.000000e+00> : vector<8x128xf32>
    %120 = tpu.matmul %118, %119, %cst_70 {dimension_numbers = #tpu.dot_dimension_numbers<[1], [0], [0], [1], [0, 0, 1, 1], [], []>} : vector<8x32xf32>, vector<32x128xf32>, vector<8x128xf32> -> vector<8x128xf32>
    %121 = arith.addf %117, %120 : vector<8x128xf32>
    %122 = vector.extract_strided_slice %121 {offsets = [0, 0], sizes = [8, 96], strides = [1, 1]} : vector<8x128xf32> to vector<8x96xf32>
    %cst_71 = arith.constant 5.000000e-01 : f32
    %123 = vector.broadcast %cst_71 : f32 to vector<8x96xf32>
    %124 = arith.mulf %123, %122 : vector<8x96xf32>
    %125 = math.tanh %124 : vector<8x96xf32>
    %cst_72 = arith.constant 5.000000e-01 : f32
    %126 = vector.broadcast %cst_72 : f32 to vector<8x96xf32>
    %127 = arith.mulf %126, %125 : vector<8x96xf32>
    %cst_73 = arith.constant 5.000000e-01 : f32
    %128 = vector.broadcast %cst_73 : f32 to vector<8x96xf32>
    %129 = arith.addf %127, %128 : vector<8x96xf32>
    %130 = vector.extract_strided_slice %129 {offsets = [0, 0], sizes = [8, 32], strides = [1, 1]} : vector<8x96xf32> to vector<8x32xf32>
    %131 = vector.extract_strided_slice %129 {offsets = [0, 32], sizes = [8, 32], strides = [1, 1]} : vector<8x96xf32> to vector<8x32xf32>
    %132 = vector.extract_strided_slice %129 {offsets = [0, 64], sizes = [8, 32], strides = [1, 1]} : vector<8x96xf32> to vector<8x32xf32>
    %133 = vector.extract_strided_slice %121 {offsets = [0, 96], sizes = [8, 32], strides = [1, 1]} : vector<8x128xf32> to vector<8x32xf32>
    %134 = math.tanh %133 : vector<8x32xf32>
    %c0_74 = arith.constant 0 : index
    %c0_75 = arith.constant 0 : index
    %135 = vector.load %arg10[%c0_74, %c0_75] : memref<8x32xf32, #tpu.memory_space<vmem>>, vector<8x32xf32>
    %136 = arith.mulf %131, %135 : vector<8x32xf32>
    %137 = arith.mulf %130, %134 : vector<8x32xf32>
    %138 = arith.addf %136, %137 : vector<8x32xf32>
    %c0_76 = arith.constant 0 : index
    %c0_77 = arith.constant 0 : index
    %139 = vector.load %arg10[%c0_76, %c0_77] : memref<8x32xf32, #tpu.memory_space<vmem>>, vector<8x32xf32>
    tpu.vector_store %arg10[%c0_76, %c0_77], %138 {strides = array<i32>} : memref<8x32xf32, #tpu.memory_space<vmem>>, vector<8x32xf32>,
    %140 = math.tanh %138 : vector<8x32xf32>
    %141 = arith.mulf %132, %140 : vector<8x32xf32>
    %c0_78 = arith.constant 0 : index
    %c0_79 = arith.constant 0 : index
    %142 = vector.load %arg9[%c0_78, %c0_79] : memref<8x32xf32, #tpu.memory_space<vmem>>, vector<8x32xf32>
    tpu.vector_store %arg9[%c0_78, %c0_79], %141 {strides = array<i32>} : memref<8x32xf32, #tpu.memory_space<vmem>>, vector<8x32xf32>,
    %c5_i32 = arith.constant 5 : i32
    %143 = arith.index_cast %c5_i32 : i32 to index
    %c0_80 = arith.constant 0 : index
    %c0_81 = arith.constant 0 : index
    %144 = vector.load %arg2[%143, %c0_80, %c0_81] : memref<8x8x128xf32, #tpu.memory_space<vmem>>, vector<1x8x128xf32>
    %145 = vector.shape_cast %144 : vector<1x8x128xf32> to vector<8x128xf32>
    %c0_82 = arith.constant 0 : index
    %c0_83 = arith.constant 0 : index
    %146 = vector.load %arg9[%c0_82, %c0_83] : memref<8x32xf32, #tpu.memory_space<vmem>>, vector<8x32xf32>
    %c0_84 = arith.constant 0 : index
    %c0_85 = arith.constant 0 : index
    %147 = vector.load %arg3[%c0_84, %c0_85] : memref<32x128xf32, #tpu.memory_space<vmem>>, vector<32x128xf32>
    %cst_86 = arith.constant dense<0.000000e+00> : vector<8x128xf32>
    %148 = tpu.matmul %146, %147, %cst_86 {dimension_numbers = #tpu.dot_dimension_numbers<[1], [0], [0], [1], [0, 0, 1, 1], [], []>} : vector<8x32xf32>, vector<32x128xf32>, vector<8x128xf32> -> vector<8x128xf32>
    %149 = arith.addf %145, %148 : vector<8x128xf32>
    %150 = vector.extract_strided_slice %149 {offsets = [0, 0], sizes = [8, 96], strides = [1, 1]} : vector<8x128xf32> to vector<8x96xf32>
    %cst_87 = arith.constant 5.000000e-01 : f32
    %151 = vector.broadcast %cst_87 : f32 to vector<8x96xf32>
    %152 = arith.mulf %151, %150 : vector<8x96xf32>
    %153 = math.tanh %152 : vector<8x96xf32>
    %cst_88 = arith.constant 5.000000e-01 : f32
    %154 = vector.broadcast %cst_88 : f32 to vector<8x96xf32>
    %155 = arith.mulf %154, %153 : vector<8x96xf32>
    %cst_89 = arith.constant 5.000000e-01 : f32
    %156 = vector.broadcast %cst_89 : f32 to vector<8x96xf32>
    %157 = arith.addf %155, %156 : vector<8x96xf32>
    %158 = vector.extract_strided_slice %157 {offsets = [0, 0], sizes = [8, 32], strides = [1, 1]} : vector<8x96xf32> to vector<8x32xf32>
    %159 = vector.extract_strided_slice %157 {offsets = [0, 32], sizes = [8, 32], strides = [1, 1]} : vector<8x96xf32> to vector<8x32xf32>
    %160 = vector.extract_strided_slice %157 {offsets = [0, 64], sizes = [8, 32], strides = [1, 1]} : vector<8x96xf32> to vector<8x32xf32>
    %161 = vector.extract_strided_slice %149 {offsets = [0, 96], sizes = [8, 32], strides = [1, 1]} : vector<8x128xf32> to vector<8x32xf32>
    %162 = math.tanh %161 : vector<8x32xf32>
    %c0_90 = arith.constant 0 : index
    %c0_91 = arith.constant 0 : index
    %163 = vector.load %arg10[%c0_90, %c0_91] : memref<8x32xf32, #tpu.memory_space<vmem>>, vector<8x32xf32>
    %164 = arith.mulf %159, %163 : vector<8x32xf32>
    %165 = arith.mulf %158, %162 : vector<8x32xf32>
    %166 = arith.addf %164, %165 : vector<8x32xf32>
    %c0_92 = arith.constant 0 : index
    %c0_93 = arith.constant 0 : index
    %167 = vector.load %arg10[%c0_92, %c0_93] : memref<8x32xf32, #tpu.memory_space<vmem>>, vector<8x32xf32>
    tpu.vector_store %arg10[%c0_92, %c0_93], %166 {strides = array<i32>} : memref<8x32xf32, #tpu.memory_space<vmem>>, vector<8x32xf32>,
    %168 = math.tanh %166 : vector<8x32xf32>
    %169 = arith.mulf %160, %168 : vector<8x32xf32>
    %c0_94 = arith.constant 0 : index
    %c0_95 = arith.constant 0 : index
    %170 = vector.load %arg9[%c0_94, %c0_95] : memref<8x32xf32, #tpu.memory_space<vmem>>, vector<8x32xf32>
    tpu.vector_store %arg9[%c0_94, %c0_95], %169 {strides = array<i32>} : memref<8x32xf32, #tpu.memory_space<vmem>>, vector<8x32xf32>,
    %c6_i32 = arith.constant 6 : i32
    %171 = arith.index_cast %c6_i32 : i32 to index
    %c0_96 = arith.constant 0 : index
    %c0_97 = arith.constant 0 : index
    %172 = vector.load %arg2[%171, %c0_96, %c0_97] : memref<8x8x128xf32, #tpu.memory_space<vmem>>, vector<1x8x128xf32>
    %173 = vector.shape_cast %172 : vector<1x8x128xf32> to vector<8x128xf32>
    %c0_98 = arith.constant 0 : index
    %c0_99 = arith.constant 0 : index
    %174 = vector.load %arg9[%c0_98, %c0_99] : memref<8x32xf32, #tpu.memory_space<vmem>>, vector<8x32xf32>
    %c0_100 = arith.constant 0 : index
    %c0_101 = arith.constant 0 : index
    %175 = vector.load %arg3[%c0_100, %c0_101] : memref<32x128xf32, #tpu.memory_space<vmem>>, vector<32x128xf32>
    %cst_102 = arith.constant dense<0.000000e+00> : vector<8x128xf32>
    %176 = tpu.matmul %174, %175, %cst_102 {dimension_numbers = #tpu.dot_dimension_numbers<[1], [0], [0], [1], [0, 0, 1, 1], [], []>} : vector<8x32xf32>, vector<32x128xf32>, vector<8x128xf32> -> vector<8x128xf32>
    %177 = arith.addf %173, %176 : vector<8x128xf32>
    %178 = vector.extract_strided_slice %177 {offsets = [0, 0], sizes = [8, 96], strides = [1, 1]} : vector<8x128xf32> to vector<8x96xf32>
    %cst_103 = arith.constant 5.000000e-01 : f32
    %179 = vector.broadcast %cst_103 : f32 to vector<8x96xf32>
    %180 = arith.mulf %179, %178 : vector<8x96xf32>
    %181 = math.tanh %180 : vector<8x96xf32>
    %cst_104 = arith.constant 5.000000e-01 : f32
    %182 = vector.broadcast %cst_104 : f32 to vector<8x96xf32>
    %183 = arith.mulf %182, %181 : vector<8x96xf32>
    %cst_105 = arith.constant 5.000000e-01 : f32
    %184 = vector.broadcast %cst_105 : f32 to vector<8x96xf32>
    %185 = arith.addf %183, %184 : vector<8x96xf32>
    %186 = vector.extract_strided_slice %185 {offsets = [0, 0], sizes = [8, 32], strides = [1, 1]} : vector<8x96xf32> to vector<8x32xf32>
    %187 = vector.extract_strided_slice %185 {offsets = [0, 32], sizes = [8, 32], strides = [1, 1]} : vector<8x96xf32> to vector<8x32xf32>
    %188 = vector.extract_strided_slice %185 {offsets = [0, 64], sizes = [8, 32], strides = [1, 1]} : vector<8x96xf32> to vector<8x32xf32>
    %189 = vector.extract_strided_slice %177 {offsets = [0, 96], sizes = [8, 32], strides = [1, 1]} : vector<8x128xf32> to vector<8x32xf32>
    %190 = math.tanh %189 : vector<8x32xf32>
    %c0_106 = arith.constant 0 : index
    %c0_107 = arith.constant 0 : index
    %191 = vector.load %arg10[%c0_106, %c0_107] : memref<8x32xf32, #tpu.memory_space<vmem>>, vector<8x32xf32>
    %192 = arith.mulf %187, %191 : vector<8x32xf32>
    %193 = arith.mulf %186, %190 : vector<8x32xf32>
    %194 = arith.addf %192, %193 : vector<8x32xf32>
    %c0_108 = arith.constant 0 : index
    %c0_109 = arith.constant 0 : index
    %195 = vector.load %arg10[%c0_108, %c0_109] : memref<8x32xf32, #tpu.memory_space<vmem>>, vector<8x32xf32>
    tpu.vector_store %arg10[%c0_108, %c0_109], %194 {strides = array<i32>} : memref<8x32xf32, #tpu.memory_space<vmem>>, vector<8x32xf32>,
    %196 = math.tanh %194 : vector<8x32xf32>
    %197 = arith.mulf %188, %196 : vector<8x32xf32>
    %c0_110 = arith.constant 0 : index
    %c0_111 = arith.constant 0 : index
    %198 = vector.load %arg9[%c0_110, %c0_111] : memref<8x32xf32, #tpu.memory_space<vmem>>, vector<8x32xf32>
    tpu.vector_store %arg9[%c0_110, %c0_111], %197 {strides = array<i32>} : memref<8x32xf32, #tpu.memory_space<vmem>>, vector<8x32xf32>,
    %c7_i32 = arith.constant 7 : i32
    %199 = arith.index_cast %c7_i32 : i32 to index
    %c0_112 = arith.constant 0 : index
    %c0_113 = arith.constant 0 : index
    %200 = vector.load %arg2[%199, %c0_112, %c0_113] : memref<8x8x128xf32, #tpu.memory_space<vmem>>, vector<1x8x128xf32>
    %201 = vector.shape_cast %200 : vector<1x8x128xf32> to vector<8x128xf32>
    %c0_114 = arith.constant 0 : index
    %c0_115 = arith.constant 0 : index
    %202 = vector.load %arg9[%c0_114, %c0_115] : memref<8x32xf32, #tpu.memory_space<vmem>>, vector<8x32xf32>
    %c0_116 = arith.constant 0 : index
    %c0_117 = arith.constant 0 : index
    %203 = vector.load %arg3[%c0_116, %c0_117] : memref<32x128xf32, #tpu.memory_space<vmem>>, vector<32x128xf32>
    %cst_118 = arith.constant dense<0.000000e+00> : vector<8x128xf32>
    %204 = tpu.matmul %202, %203, %cst_118 {dimension_numbers = #tpu.dot_dimension_numbers<[1], [0], [0], [1], [0, 0, 1, 1], [], []>} : vector<8x32xf32>, vector<32x128xf32>, vector<8x128xf32> -> vector<8x128xf32>
    %205 = arith.addf %201, %204 : vector<8x128xf32>
    %206 = vector.extract_strided_slice %205 {offsets = [0, 0], sizes = [8, 96], strides = [1, 1]} : vector<8x128xf32> to vector<8x96xf32>
    %cst_119 = arith.constant 5.000000e-01 : f32
    %207 = vector.broadcast %cst_119 : f32 to vector<8x96xf32>
    %208 = arith.mulf %207, %206 : vector<8x96xf32>
    %209 = math.tanh %208 : vector<8x96xf32>
    %cst_120 = arith.constant 5.000000e-01 : f32
    %210 = vector.broadcast %cst_120 : f32 to vector<8x96xf32>
    %211 = arith.mulf %210, %209 : vector<8x96xf32>
    %cst_121 = arith.constant 5.000000e-01 : f32
    %212 = vector.broadcast %cst_121 : f32 to vector<8x96xf32>
    %213 = arith.addf %211, %212 : vector<8x96xf32>
    %214 = vector.extract_strided_slice %213 {offsets = [0, 0], sizes = [8, 32], strides = [1, 1]} : vector<8x96xf32> to vector<8x32xf32>
    %215 = vector.extract_strided_slice %213 {offsets = [0, 32], sizes = [8, 32], strides = [1, 1]} : vector<8x96xf32> to vector<8x32xf32>
    %216 = vector.extract_strided_slice %213 {offsets = [0, 64], sizes = [8, 32], strides = [1, 1]} : vector<8x96xf32> to vector<8x32xf32>
    %217 = vector.extract_strided_slice %205 {offsets = [0, 96], sizes = [8, 32], strides = [1, 1]} : vector<8x128xf32> to vector<8x32xf32>
    %218 = math.tanh %217 : vector<8x32xf32>
    %c0_122 = arith.constant 0 : index
    %c0_123 = arith.constant 0 : index
    %219 = vector.load %arg10[%c0_122, %c0_123] : memref<8x32xf32, #tpu.memory_space<vmem>>, vector<8x32xf32>
    %220 = arith.mulf %215, %219 : vector<8x32xf32>
    %221 = arith.mulf %214, %218 : vector<8x32xf32>
    %222 = arith.addf %220, %221 : vector<8x32xf32>
    %c0_124 = arith.constant 0 : index
    %c0_125 = arith.constant 0 : index
    %223 = vector.load %arg10[%c0_124, %c0_125] : memref<8x32xf32, #tpu.memory_space<vmem>>, vector<8x32xf32>
    tpu.vector_store %arg10[%c0_124, %c0_125], %222 {strides = array<i32>} : memref<8x32xf32, #tpu.memory_space<vmem>>, vector<8x32xf32>,
    %224 = math.tanh %222 : vector<8x32xf32>
    %225 = arith.mulf %216, %224 : vector<8x32xf32>
    %c0_126 = arith.constant 0 : index
    %c0_127 = arith.constant 0 : index
    %226 = vector.load %arg9[%c0_126, %c0_127] : memref<8x32xf32, #tpu.memory_space<vmem>>, vector<8x32xf32>
    tpu.vector_store %arg9[%c0_126, %c0_127], %225 {strides = array<i32>} : memref<8x32xf32, #tpu.memory_space<vmem>>, vector<8x32xf32>,
    %c8_i32 = arith.constant 8 : i32
    %c0_i32_128 = arith.constant 0 : i32
    %227 = arith.cmpi eq, %arg1, %c0_i32_128 : i32
    %228 = arith.extui %227 : i1 to i32
    %c0_i32_129 = arith.constant 0 : i32
    %229 = arith.cmpi ne, %228, %c0_i32_129 : i32
    scf.if %229 {
      %c0_130 = arith.constant 0 : index
      %c0_131 = arith.constant 0 : index
      %230 = vector.load %arg9[%c0_130, %c0_131] : memref<8x32xf32, #tpu.memory_space<vmem>>, vector<8x32xf32>
      %cst_132 = arith.constant 0.000000e+00 : f32
      %231 = vector.broadcast %cst_132 : f32 to vector<8x32xf32>
      %232 = arith.maximumf %230, %231 : vector<8x32xf32>
      %c0_133 = arith.constant 0 : index
      %c0_134 = arith.constant 0 : index
      %233 = vector.load %arg4[%c0_133, %c0_134] : memref<32x128xf32, #tpu.memory_space<vmem>>, vector<32x128xf32>
      %cst_135 = arith.constant dense<0.000000e+00> : vector<8x128xf32>
      %234 = tpu.matmul %232, %233, %cst_135 {dimension_numbers = #tpu.dot_dimension_numbers<[1], [0], [0], [1], [0, 0, 1, 1], [], []>} : vector<8x32xf32>, vector<32x128xf32>, vector<8x128xf32> -> vector<8x128xf32>
      %c0_136 = arith.constant 0 : index
      %c0_137 = arith.constant 0 : index
      %235 = vector.load %arg5[%c0_136, %c0_137] : memref<1x128xf32, #tpu.memory_space<vmem>>, vector<1x128xf32>
      %236 = vector.broadcast %235 : vector<1x128xf32> to vector<8x128xf32>
      %237 = arith.addf %234, %236 : vector<8x128xf32>
      %cst_138 = arith.constant 0.000000e+00 : f32
      %238 = vector.broadcast %cst_138 : f32 to vector<8x128xf32>
      %239 = arith.maximumf %237, %238 : vector<8x128xf32>
      %c0_139 = arith.constant 0 : index
      %c0_140 = arith.constant 0 : index
      %240 = vector.load %arg6[%c0_139, %c0_140] : memref<128x128xf32, #tpu.memory_space<vmem>>, vector<128x128xf32>
      %cst_141 = arith.constant dense<0.000000e+00> : vector<8x128xf32>
      %241 = tpu.matmul %239, %240, %cst_141 {dimension_numbers = #tpu.dot_dimension_numbers<[1], [0], [0], [1], [0, 0, 1, 1], [], []>} : vector<8x128xf32>, vector<128x128xf32>, vector<8x128xf32> -> vector<8x128xf32>
      %c0_142 = arith.constant 0 : index
      %c0_143 = arith.constant 0 : index
      %242 = vector.load %arg7[%c0_142, %c0_143] : memref<1x128xf32, #tpu.memory_space<vmem>>, vector<1x128xf32>
      %243 = vector.broadcast %242 : vector<1x128xf32> to vector<8x128xf32>
      %244 = arith.addf %241, %243 : vector<8x128xf32>
      %c0_144 = arith.constant 0 : index
      %c0_145 = arith.constant 0 : index
      %245 = vector.load %arg8[%c0_144, %c0_145] : memref<8x128xf32, #tpu.memory_space<vmem>>, vector<8x128xf32>
      tpu.vector_store %arg8[%c0_144, %c0_145], %244 {strides = array<i32>} : memref<8x128xf32, #tpu.memory_space<vmem>>, vector<8x128xf32>,
    } else {
    }
    return
  }
  func.func @transform_0(%arg0: i32, %arg1: i32) -> (i32, i32, i32) {
    %c0_i32 = arith.constant 0 : i32
    %c0_i32_0 = arith.constant 0 : i32
    return %arg1, %arg0, %c0_i32 : i32, i32, i32
  }
  func.func @transform_1(%arg0: i32, %arg1: i32) -> (i32, i32) {
    %c0_i32 = arith.constant 0 : i32
    %c0_i32_0 = arith.constant 0 : i32
    %c0_i32_1 = arith.constant 0 : i32
    return %c0_i32, %c0_i32_0 : i32, i32
  }
  func.func @transform_2(%arg0: i32, %arg1: i32) -> (i32, i32) {
    %c0_i32 = arith.constant 0 : i32
    %c0_i32_0 = arith.constant 0 : i32
    %c0_i32_1 = arith.constant 0 : i32
    return %c0_i32, %c0_i32_0 : i32, i32
  }
  func.func @transform_3(%arg0: i32, %arg1: i32) -> (i32, i32) {
    %c0_i32 = arith.constant 0 : i32
    %c0_i32_0 = arith.constant 0 : i32
    %c0_i32_1 = arith.constant 0 : i32
    return %c0_i32, %c0_i32_0 : i32, i32
  }
  func.func @transform_4(%arg0: i32, %arg1: i32) -> (i32, i32) {
    %c0_i32 = arith.constant 0 : i32
    %c0_i32_0 = arith.constant 0 : i32
    %c0_i32_1 = arith.constant 0 : i32
    return %c0_i32, %c0_i32_0 : i32, i32
  }
  func.func @transform_5(%arg0: i32, %arg1: i32) -> (i32, i32) {
    %c0_i32 = arith.constant 0 : i32
    %c0_i32_0 = arith.constant 0 : i32
    %c0_i32_1 = arith.constant 0 : i32
    return %c0_i32, %c0_i32_0 : i32, i32
  }
  func.func @transform_6(%arg0: i32, %arg1: i32) -> (i32, i32) {
    %c0_i32 = arith.constant 0 : i32
    %c0_i32_0 = arith.constant 0 : i32
    return %arg0, %c0_i32 : i32, i32
  }
}

</mosaic_0001>

<llo_original>
// kernel: tpu_custom_call.1
$region0: #{tpu_custom_call.1}
  #allocation0 [shape = 'u32[]', space=smem, size = 0x4, offset = 0x4, fixed_abs, tag = 'smem constant byte address 0x4 - core index']
  #allocation1 [shape = 'u32[144,128]{1,0:T(1,128)}', space=vmem, size = 0x12000, scoped, tag = 'internal scratch']
  #allocation2 [shape = 'f32[8,32]{1,0:T(8,128)}', space=vmem, size = 0x1000, scoped, tag = 'scratch operand']
  #allocation3 [shape = 'f32[8,32]{1,0:T(8,128)}', space=vmem, size = 0x1000, scoped, tag = 'scratch operand']
  %s0 = inlined_call_operand.hbm [shape: f32[8,8,128], index: 0, kind: input, shape index: {}]
  %s1 = inlined_call_operand.hbm [shape: f32[32,128], index: 1, kind: input, shape index: {}]
  %s2 = inlined_call_operand.hbm [shape: f32[32,128], index: 2, kind: input, shape index: {}]
  %s3 = inlined_call_operand.vmem [shape: f32[1,128], index: 3, kind: input, shape index: {}]
  %s4 = inlined_call_operand.hbm [shape: f32[128,128], index: 4, kind: input, shape index: {}]
  %s5 = inlined_call_operand.vmem [shape: f32[1,128], index: 5, kind: input, shape index: {}]
  %s6 = inlined_call_operand.hbm [shape: f32[8,128], index: 6, kind: output, shape index: {}]
  %s7 = sld [smem:[#allocation0]]
  $region58: #{tpu_custom_call.1} parent=0
    _
  %s9 = ssub.s32 1, %s7
  %s10 = scalar_select 0, %s9, %s7
  $region1: #{tpu_custom_call.1} parent=0
    #allocation4 [shape = 'u8[32768]{0}', space=vmem, size = 0x8000, scoped, tag = 'input window, operand 0, single buffered']
    #allocation5 [shape = 's32[1]{0}', space=sflag, size = 0x4, scoped, tag = 'scoped memory for tpu_custom_call.1']
    #allocation6 [shape = 's32[1]{0}', space=sflag, size = 0x4, scoped, tag = 'scoped memory for tpu_custom_call.1']
    #allocation7 [shape = 'u8[16384]{0}', space=vmem, size = 0x4000, scoped, tag = 'input window, operand 1, single buffered']
    #allocation8 [shape = 's32[1]{0}', space=sflag, size = 0x4, scoped, tag = 'scoped memory for tpu_custom_call.1']
    #allocation9 [shape = 'u8[16384]{0}', space=vmem, size = 0x4000, scoped, tag = 'input window, operand 2, single buffered']
    #allocation10 [shape = 'u8[65536]{0}', space=vmem, size = 0x10000, scoped, tag = 'input window, operand 4, single buffered']
    #allocation11 [shape = 's32[1]{0}', space=sflag, size = 0x4, scoped, tag = 'scoped memory for tpu_custom_call.1']
    #allocation12 [shape = 'u8[4096]{0}', space=vmem, size = 0x1000, scoped, tag = 'output window, operand 0, single buffered']
    %11 = vsyncpa [#allocation5], 0
    %12 = vsyncpa [#allocation8], 0
    %13 = vsyncpa [#allocation11], 0
    %14 = vsyncpa [#allocation6], 0
    // Predicated region
    $region2: #{tpu_custom_call.1} parent=1 // pred_check
      _
    $region3: #{tpu_custom_call.1} parent=1 // pred_check_branch
      %16 = sbr.rel (0) target = $region5
    $region4: #{tpu_custom_call.1} parent=1 // pred_region
      %s18 = ssub.s32 1024, 1024
      %19 = vsyncadd [#allocation5], %s18
      %s20 = sshll.u32 [#allocation4], 4
      %s21 = int_to_ptr.vmem [resolvable:$true] %s20
      %26 = dma.hbm_to_vmem [thread:$0]  %s0, 1024, %s21, [#allocation5], 128, 128, 8
    $region5: #{tpu_custom_call.1} parent=1 // pred_fallthru
      _
    // Predicated region
    $region6: #{tpu_custom_call.1} parent=1 // pred_check
      _
    $region7: #{tpu_custom_call.1} parent=1 // pred_check_branch
      %28 = sbr.rel (0) target = $region9
    $region8: #{tpu_custom_call.1} parent=1 // pred_region
      %s30 = ssub.s32 512, 512
      %31 = vsyncadd [#allocation8], %s30
      %s32 = sshll.u32 [#allocation7], 4
      %s33 = int_to_ptr.vmem [resolvable:$true] %s32
      %38 = dma.hbm_to_vmem [thread:$0]  %s1, 512, %s33, [#allocation8], 128, 128, 8
    $region9: #{tpu_custom_call.1} parent=1 // pred_fallthru
      _
    // Predicated region
    $region10: #{tpu_custom_call.1} parent=1 // pred_check
      _
    $region11: #{tpu_custom_call.1} parent=1 // pred_check_branch
      %40 = sbr.rel (0) target = $region13
    $region12: #{tpu_custom_call.1} parent=1 // pred_region
      %s42 = ssub.s32 512, 512
      %43 = vsyncadd [#allocation8], %s42
      %s44 = sshll.u32 [#allocation9], 4
      %s45 = int_to_ptr.vmem [resolvable:$true] %s44
      %50 = dma.hbm_to_vmem [thread:$0]  %s2, 512, %s45, [#allocation8], 128, 128, 8
    $region13: #{tpu_custom_call.1} parent=1 // pred_fallthru
      _
    // Predicated region
    $region14: #{tpu_custom_call.1} parent=1 // pred_check
      _
    $region15: #{tpu_custom_call.1} parent=1 // pred_check_branch
      %52 = sbr.rel (0) target = $region17
    $region16: #{tpu_custom_call.1} parent=1 // pred_region
      _
    $region17: #{tpu_custom_call.1} parent=1 // pred_fallthru
      _
    // Predicated region
    $region18: #{tpu_custom_call.1} parent=1 // pred_check
      _
    $region19: #{tpu_custom_call.1} parent=1 // pred_check_branch
      %54 = sbr.rel (0) target = $region21
    $region20: #{tpu_custom_call.1} parent=1 // pred_region
      %s56 = ssub.s32 2048, 2048
      %57 = vsyncadd [#allocation11], %s56
      %s58 = sshll.u32 [#allocation10], 4
      %s59 = int_to_ptr.vmem [resolvable:$true] %s58
      %64 = dma.hbm_to_vmem [thread:$0]  %s4, 2048, %s59, [#allocation11], 128, 128, 8
    $region21: #{tpu_custom_call.1} parent=1 // pred_fallthru
      _
    // Predicated region
    $region22: #{tpu_custom_call.1} parent=1 // pred_check
      _
    $region23: #{tpu_custom_call.1} parent=1 // pred_check_branch
      %66 = sbr.rel (0) target = $region25
    $region24: #{tpu_custom_call.1} parent=1 // pred_region
      _
    $region25: #{tpu_custom_call.1} parent=1 // pred_fallthru
      _
    // Predicated region
    $region26: #{tpu_custom_call.1} parent=1 // pred_check
      _
    $region27: #{tpu_custom_call.1} parent=1 // pred_check_branch
      %68 = sbr.rel (0) target = $region29
    $region28: #{tpu_custom_call.1} parent=1 // pred_region
      %69 = dma.done [#allocation5], 1024
    $region29: #{tpu_custom_call.1} parent=1 // pred_fallthru
      _
    // Predicated region
    $region30: #{tpu_custom_call.1} parent=1 // pred_check
      _
    $region31: #{tpu_custom_call.1} parent=1 // pred_check_branch
      %71 = sbr.rel (0) target = $region33
    $region32: #{tpu_custom_call.1} parent=1 // pred_region
      %72 = dma.done [#allocation8], 512
    $region33: #{tpu_custom_call.1} parent=1 // pred_fallthru
      _
    // Predicated region
    $region34: #{tpu_custom_call.1} parent=1 // pred_check
      _
    $region35: #{tpu_custom_call.1} parent=1 // pred_check_branch
      %74 = sbr.rel (0) target = $region37
    $region36: #{tpu_custom_call.1} parent=1 // pred_region
      %75 = dma.done [#allocation8], 512
    $region37: #{tpu_custom_call.1} parent=1 // pred_fallthru
      _
    // Predicated region
    $region38: #{tpu_custom_call.1} parent=1 // pred_check
      _
    $region39: #{tpu_custom_call.1} parent=1 // pred_check_branch
      %77 = sbr.rel (0) target = $region41
    $region40: #{tpu_custom_call.1} parent=1 // pred_region
      %78 = dma.done [#allocation11], 2048
    $region41: #{tpu_custom_call.1} parent=1 // pred_fallthru
      _
    %p79 = scmp.eq.s32.totalorder 0, 0
    // Predicated region
    $region42: #{tpu_custom_call.1} parent=1 // pred_check
      %p80 = pneg %p79
    $region43: #{tpu_custom_call.1} parent=1 // pred_check_branch
      %82 = sbr.rel (%p80) target = $region45
    $region44: #{tpu_custom_call.1} parent=1 // pred_region
      %vm83 = vcmask 261120
      %84 = vst.msk [vmem:[#allocation2] sm:$0xff] %vm83, 0.0
      %85 = vst.msk [vmem:[#allocation3] sm:$0xff] %vm83, 0.0
    $region45: #{tpu_custom_call.1} parent=1 // pred_fallthru
      _
    %v86 = vld [vmem:[#allocation4] sm:$0xff]
    %v87 = vld [vmem:[#allocation2] sm:$0xff]
    %v88 = vld [vmem:[#allocation7] sm:$0xff]
    %v89 = vld [vmem:[#allocation7 + $0x8] sm:$0xff]
    %v90 = vld [vmem:[#allocation7 + $0x10] sm:$0xff]
    %v91 = vld [vmem:[#allocation7 + $0x18] sm:$0xff]
    %vm92 = vcmask 261120
    %v94 = vsel %vm92, %v87, 0
    %96 = vmatprep.subr.mxu0 0.0
    %97 = vmatpush1.msra.mxu0 0.0
    %98 = vmatprep.subr.mxu0 0.0
    %99 = vmatpush1.msra.mxu0 0.0
    %100 = vmatprep.subr.mxu0 0.0
    %101 = vmatpush1.msra.mxu0 0.0
    %102 = vmatprep.subr.mxu0 0.0
    %103 = vmatpush1.msra.mxu0 0.0
    %104 = vmatprep.subr.mxu0 0.0
    %105 = vmatpush1.msra.mxu0 0.0
    %106 = vmatprep.subr.mxu0 0.0
    %107 = vmatpush1.msra.mxu0 0.0
    %108 = vmatprep.subr.mxu0 0.0
    %109 = vmatpush1.msra.mxu0 0.0
    %110 = vmatprep.subr.mxu0 0.0
    %111 = vmatpush1.msra.mxu0 0.0
    %112 = vmatprep.subr.mxu0 0.0
    %113 = vmatpush1.msra.mxu0 0.0
    %114 = vmatprep.subr.mxu0 0.0
    %115 = vmatpush1.msra.mxu0 0.0
    %116 = vmatprep.subr.mxu0 0.0
    %117 = vmatpush1.msra.mxu0 0.0
    %118 = vmatprep.subr.mxu0 0.0
    %119 = vmatpush1.msra.mxu0 0.0
    %120 = vmatprep.subr.mxu0 0.0
    %121 = vmatpush1.msra.mxu0 %v91
    %122 = vmatprep.subr.mxu0 0.0
    %123 = vmatpush1.msra.mxu0 %v90
    %124 = vmatprep.subr.mxu0 0.0
    %125 = vmatpush1.msra.mxu0 %v89
    %126 = vmatprep.subr.mxu0 0.0
    %127 = vmatpush1.msra.mxu0 %v88
    %128 = vmatprep.subr.mxu0 0.0
    %129 = vmatpush2.msra.mxu0 0.0
    %130 = vmatprep.subr.mxu0 0.0
    %131 = vmatpush2.msra.mxu0 0.0
    %132 = vmatprep.subr.mxu0 0.0
    %133 = vmatpush2.msra.mxu0 0.0
    %134 = vmatprep.subr.mxu0 0.0
    %135 = vmatpush2.msra.mxu0 0.0
    %136 = vmatprep.subr.mxu0 0.0
    %137 = vmatpush2.msra.mxu0 0.0
    %138 = vmatprep.subr.mxu0 0.0
    %139 = vmatpush2.msra.mxu0 0.0
    %140 = vmatprep.subr.mxu0 0.0
    %141 = vmatpush2.msra.mxu0 0.0
    %142 = vmatprep.subr.mxu0 0.0
    %143 = vmatpush2.msra.mxu0 0.0
    %144 = vmatprep.subr.mxu0 0.0
    %145 = vmatpush2.msra.mxu0 0.0
    %146 = vmatprep.subr.mxu0 0.0
    %147 = vmatpush2.msra.mxu0 0.0
    %148 = vmatprep.subr.mxu0 0.0
    %149 = vmatpush2.msra.mxu0 0.0
    %150 = vmatprep.subr.mxu0 0.0
    %151 = vmatpush2.msra.mxu0 0.0
    %152 = vmatprep.subr.mxu0 0.0
    %153 = vmatpush2.msra.mxu0 0.0
    %154 = vmatprep.subr.mxu0 0.0
    %155 = vmatpush2.msra.mxu0 0.0
    %156 = vmatprep.subr.mxu0 0.0
    %157 = vmatpush2.msra.mxu0 0.0
    %158 = vmatprep.subr.mxu0 0.0
    %159 = vmatpush2.msra.mxu0 0.0
    %160 = vmatprep.mubr.f32.mxu0 0.0
    %161 = vmatmul.mubr.f32.gmra.mxu0 %v94
    %v162 = vpop.f32.mrf.mxu0
    %v163 = vadd.f32 0.0, %v162
    %v164 = vpop.f32.mrf.mxu0
    %165 = vdwg.mxu0
    %v166 = vadd.f32 %v86, %v163
    %v167 = vmul.f32 %v166, 0.5
    %v168 = vtanh.pop %v167
    %v169 = vmul.f32 %v168, 0.5
    %v170 = vadd.f32 %v169, 0.5
    %v171 = vtanh.pop %v166
    %v172 = vld [vmem:[#allocation3] sm:$0xff]
    %174 = vrot.lane.b32.xlu0 %v172, 32
    %v175 = vpop.permute.xlu0 %174
    %v177 = vmul.f32 %v170, %v175
    %179 = vrot.lane.b32.xlu0 %v171, 32
    %v180 = vpop.permute.xlu0 %179
    %v182 = vmul.f32 %v170, %v180
    %184 = vrot.lane.b32.xlu0 %v182, 32
    %v185 = vpop.permute.xlu0 %184
    %v187 = vadd.f32 %v177, %v185
    %189 = vrot.lane.b32.xlu0 %v187, 96
    %v190 = vpop.permute.xlu0 %189
    %192 = vst.msk [vmem:[#allocation3] sm:$0xff] %vm92, %v190
    %v193 = vtanh.pop %v187
    %195 = vrot.lane.b32.xlu0 %v193, 32
    %v196 = vpop.permute.xlu0 %195
    %v198 = vmul.f32 %v170, %v196
    %200 = vrot.lane.b32.xlu0 %v198, 64
    %v201 = vpop.permute.xlu0 %200
    %203 = vst.msk [vmem:[#allocation2] sm:$0xff] %vm92, %v201
    %s204 = scalar_lea.vmem [#allocation4], 8
    %v205 = vld [vmem:[%s204] sm:$0xff]
    %v206 = vld [vmem:[#allocation2] sm:$0xff]
    %v207 = vld [vmem:[#allocation7] sm:$0xff]
    %v208 = vld [vmem:[#allocation7 + $0x8] sm:$0xff]
    %v209 = vld [vmem:[#allocation7 + $0x10] sm:$0xff]
    %v210 = vld [vmem:[#allocation7 + $0x18] sm:$0xff]
    %v212 = vsel %vm92, %v206, 0
    %214 = vmatprep.subr.mxu0 0.0
    %215 = vmatpush1.msra.mxu0 0.0
    %216 = vmatprep.subr.mxu0 0.0
    %217 = vmatpush1.msra.mxu0 0.0
    %218 = vmatprep.subr.mxu0 0.0
    %219 = vmatpush1.msra.mxu0 0.0
    %220 = vmatprep.subr.mxu0 0.0
    %221 = vmatpush1.msra.mxu0 0.0
    %222 = vmatprep.subr.mxu0 0.0
    %223 = vmatpush1.msra.mxu0 0.0
    %224 = vmatprep.subr.mxu0 0.0
    %225 = vmatpush1.msra.mxu0 0.0
    %226 = vmatprep.subr.mxu0 0.0
    %227 = vmatpush1.msra.mxu0 0.0
    %228 = vmatprep.subr.mxu0 0.0
    %229 = vmatpush1.msra.mxu0 0.0
    %230 = vmatprep.subr.mxu0 0.0
    %231 = vmatpush1.msra.mxu0 0.0
    %232 = vmatprep.subr.mxu0 0.0
    %233 = vmatpush1.msra.mxu0 0.0
    %234 = vmatprep.subr.mxu0 0.0
    %235 = vmatpush1.msra.mxu0 0.0
    %236 = vmatprep.subr.mxu0 0.0
    %237 = vmatpush1.msra.mxu0 0.0
    %238 = vmatprep.subr.mxu0 0.0
    %239 = vmatpush1.msra.mxu0 %v210
    %240 = vmatprep.subr.mxu0 0.0
    %241 = vmatpush1.msra.mxu0 %v209
    %242 = vmatprep.subr.mxu0 0.0
    %243 = vmatpush1.msra.mxu0 %v208
    %244 = vmatprep.subr.mxu0 0.0
    %245 = vmatpush1.msra.mxu0 %v207
    %246 = vmatprep.subr.mxu0 0.0
    %247 = vmatpush2.msra.mxu0 0.0
    %248 = vmatprep.subr.mxu0 0.0
    %249 = vmatpush2.msra.mxu0 0.0
    %250 = vmatprep.subr.mxu0 0.0
    %251 = vmatpush2.msra.mxu0 0.0
    %252 = vmatprep.subr.mxu0 0.0
    %253 = vmatpush2.msra.mxu0 0.0
    %254 = vmatprep.subr.mxu0 0.0
    %255 = vmatpush2.msra.mxu0 0.0
    %256 = vmatprep.subr.mxu0 0.0
    %257 = vmatpush2.msra.mxu0 0.0
    %258 = vmatprep.subr.mxu0 0.0
    %259 = vmatpush2.msra.mxu0 0.0
    %260 = vmatprep.subr.mxu0 0.0
    %261 = vmatpush2.msra.mxu0 0.0
    %262 = vmatprep.subr.mxu0 0.0
    %263 = vmatpush2.msra.mxu0 0.0
    %264 = vmatprep.subr.mxu0 0.0
    %265 = vmatpush2.msra.mxu0 0.0
    %266 = vmatprep.subr.mxu0 0.0
    %267 = vmatpush2.msra.mxu0 0.0
    %268 = vmatprep.subr.mxu0 0.0
    %269 = vmatpush2.msra.mxu0 0.0
    %270 = vmatprep.subr.mxu0 0.0
    %271 = vmatpush2.msra.mxu0 0.0
    %272 = vmatprep.subr.mxu0 0.0
    %273 = vmatpush2.msra.mxu0 0.0
    %274 = vmatprep.subr.mxu0 0.0
    %275 = vmatpush2.msra.mxu0 0.0
    %276 = vmatprep.subr.mxu0 0.0
    %277 = vmatpush2.msra.mxu0 0.0
    %278 = vmatprep.mubr.f32.mxu0 0.0
    %279 = vmatmul.mubr.f32.gmra.mxu0 %v212
    %v280 = vpop.f32.mrf.mxu0
    %v281 = vadd.f32 0.0, %v280
    %v282 = vpop.f32.mrf.mxu0
    %283 = vdwg.mxu0
    %v284 = vadd.f32 %v205, %v281
    %v285 = vmul.f32 %v284, 0.5
    %v286 = vtanh.pop %v285
    %v287 = vmul.f32 %v286, 0.5
    %v288 = vadd.f32 %v287, 0.5
    %v289 = vtanh.pop %v284
    %v290 = vld [vmem:[#allocation3] sm:$0xff]
    %292 = vrot.lane.b32.xlu0 %v290, 32
    %v293 = vpop.permute.xlu0 %292
    %v295 = vmul.f32 %v288, %v293
    %297 = vrot.lane.b32.xlu0 %v289, 32
    %v298 = vpop.permute.xlu0 %297
    %v300 = vmul.f32 %v288, %v298
    %302 = vrot.lane.b32.xlu0 %v300, 32
    %v303 = vpop.permute.xlu0 %302
    %v305 = vadd.f32 %v295, %v303
    %307 = vrot.lane.b32.xlu0 %v305, 96
    %v308 = vpop.permute.xlu0 %307
    %310 = vst.msk [vmem:[#allocation3] sm:$0xff] %vm92, %v308
    %v311 = vtanh.pop %v305
    %313 = vrot.lane.b32.xlu0 %v311, 32
    %v314 = vpop.permute.xlu0 %313
    %v316 = vmul.f32 %v288, %v314
    %318 = vrot.lane.b32.xlu0 %v316, 64
    %v319 = vpop.permute.xlu0 %318
    %321 = vst.msk [vmem:[#allocation2] sm:$0xff] %vm92, %v319
    %s322 = scalar_lea.vmem [#allocation4], 16
    %v323 = vld [vmem:[%s322] sm:$0xff]
    %v324 = vld [vmem:[#allocation2] sm:$0xff]
    %v325 = vld [vmem:[#allocation7] sm:$0xff]
    %v326 = vld [vmem:[#allocation7 + $0x8] sm:$0xff]
    %v327 = vld [vmem:[#allocation7 + $0x10] sm:$0xff]
    %v328 = vld [vmem:[#allocation7 + $0x18] sm:$0xff]
    %v330 = vsel %vm92, %v324, 0
    %332 = vmatprep.subr.mxu0 0.0
    %333 = vmatpush1.msra.mxu0 0.0
    %334 = vmatprep.subr.mxu0 0.0
    %335 = vmatpush1.msra.mxu0 0.0
    %336 = vmatprep.subr.mxu0 0.0
    %337 = vmatpush1.msra.mxu0 0.0
    %338 = vmatprep.subr.mxu0 0.0
    %339 = vmatpush1.msra.mxu0 0.0
    %340 = vmatprep.subr.mxu0 0.0
    %341 = vmatpush1.msra.mxu0 0.0
    %342 = vmatprep.subr.mxu0 0.0
    %343 = vmatpush1.msra.mxu0 0.0
    %344 = vmatprep.subr.mxu0 0.0
    %345 = vmatpush1.msra.mxu0 0.0
    %346 = vmatprep.subr.mxu0 0.0
    %347 = vmatpush1.msra.mxu0 0.0
    %348 = vmatprep.subr.mxu0 0.0
    %349 = vmatpush1.msra.mxu0 0.0
    %350 = vmatprep.subr.mxu0 0.0
    %351 = vmatpush1.msra.mxu0 0.0
    %352 = vmatprep.subr.mxu0 0.0
    %353 = vmatpush1.msra.mxu0 0.0
    %354 = vmatprep.subr.mxu0 0.0
    %355 = vmatpush1.msra.mxu0 0.0
    %356 = vmatprep.subr.mxu0 0.0
    %357 = vmatpush1.msra.mxu0 %v328
    %358 = vmatprep.subr.mxu0 0.0
    %359 = vmatpush1.msra.mxu0 %v327
    %360 = vmatprep.subr.mxu0 0.0
    %361 = vmatpush1.msra.mxu0 %v326
    %362 = vmatprep.subr.mxu0 0.0
    %363 = vmatpush1.msra.mxu0 %v325
    %364 = vmatprep.subr.mxu0 0.0
    %365 = vmatpush2.msra.mxu0 0.0
    %366 = vmatprep.subr.mxu0 0.0
    %367 = vmatpush2.msra.mxu0 0.0
    %368 = vmatprep.subr.mxu0 0.0
    %369 = vmatpush2.msra.mxu0 0.0
    %370 = vmatprep.subr.mxu0 0.0
    %371 = vmatpush2.msra.mxu0 0.0
    %372 = vmatprep.subr.mxu0 0.0
    %373 = vmatpush2.msra.mxu0 0.0
    %374 = vmatprep.subr.mxu0 0.0
    %375 = vmatpush2.msra.mxu0 0.0
    %376 = vmatprep.subr.mxu0 0.0
    %377 = vmatpush2.msra.mxu0 0.0
    %378 = vmatprep.subr.mxu0 0.0
    %379 = vmatpush2.msra.mxu0 0.0
    %380 = vmatprep.subr.mxu0 0.0
    %381 = vmatpush2.msra.mxu0 0.0
    %382 = vmatprep.subr.mxu0 0.0
    %383 = vmatpush2.msra.mxu0 0.0
    %384 = vmatprep.subr.mxu0 0.0
    %385 = vmatpush2.msra.mxu0 0.0
    %386 = vmatprep.subr.mxu0 0.0
    %387 = vmatpush2.msra.mxu0 0.0
    %388 = vmatprep.subr.mxu0 0.0
    %389 = vmatpush2.msra.mxu0 0.0
    %390 = vmatprep.subr.mxu0 0.0
    %391 = vmatpush2.msra.mxu0 0.0
    %392 = vmatprep.subr.mxu0 0.0
    %393 = vmatpush2.msra.mxu0 0.0
    %394 = vmatprep.subr.mxu0 0.0
    %395 = vmatpush2.msra.mxu0 0.0
    %396 = vmatprep.mubr.f32.mxu0 0.0
    %397 = vmatmul.mubr.f32.gmra.mxu0 %v330
    %v398 = vpop.f32.mrf.mxu0
    %v399 = vadd.f32 0.0, %v398
    %v400 = vpop.f32.mrf.mxu0
    %401 = vdwg.mxu0
    %v402 = vadd.f32 %v323, %v399
    %v403 = vmul.f32 %v402, 0.5
    %v404 = vtanh.pop %v403
    %v405 = vmul.f32 %v404, 0.5
    %v406 = vadd.f32 %v405, 0.5
    %v407 = vtanh.pop %v402
    %v408 = vld [vmem:[#allocation3] sm:$0xff]
    %410 = vrot.lane.b32.xlu0 %v408, 32
    %v411 = vpop.permute.xlu0 %410
    %v413 = vmul.f32 %v406, %v411
    %415 = vrot.lane.b32.xlu0 %v407, 32
    %v416 = vpop.permute.xlu0 %415
    %v418 = vmul.f32 %v406, %v416
    %420 = vrot.lane.b32.xlu0 %v418, 32
    %v421 = vpop.permute.xlu0 %420
    %v423 = vadd.f32 %v413, %v421
    %425 = vrot.lane.b32.xlu0 %v423, 96
    %v426 = vpop.permute.xlu0 %425
    %428 = vst.msk [vmem:[#allocation3] sm:$0xff] %vm92, %v426
    %v429 = vtanh.pop %v423
    %431 = vrot.lane.b32.xlu0 %v429, 32
    %v432 = vpop.permute.xlu0 %431
    %v434 = vmul.f32 %v406, %v432
    %436 = vrot.lane.b32.xlu0 %v434, 64
    %v437 = vpop.permute.xlu0 %436
    %439 = vst.msk [vmem:[#allocation2] sm:$0xff] %vm92, %v437
    %s440 = scalar_lea.vmem [#allocation4], 24
    %v441 = vld [vmem:[%s440] sm:$0xff]
    %v442 = vld [vmem:[#allocation2] sm:$0xff]
    %v443 = vld [vmem:[#allocation7] sm:$0xff]
    %v444 = vld [vmem:[#allocation7 + $0x8] sm:$0xff]
    %v445 = vld [vmem:[#allocation7 + $0x10] sm:$0xff]
    %v446 = vld [vmem:[#allocation7 + $0x18] sm:$0xff]
    %v448 = vsel %vm92, %v442, 0
    %450 = vmatprep.subr.mxu0 0.0
    %451 = vmatpush1.msra.mxu0 0.0
    %452 = vmatprep.subr.mxu0 0.0
    %453 = vmatpush1.msra.mxu0 0.0
    %454 = vmatprep.subr.mxu0 0.0
    %455 = vmatpush1.msra.mxu0 0.0
    %456 = vmatprep.subr.mxu0 0.0
    %457 = vmatpush1.msra.mxu0 0.0
    %458 = vmatprep.subr.mxu0 0.0
    %459 = vmatpush1.msra.mxu0 0.0
    %460 = vmatprep.subr.mxu0 0.0
    %461 = vmatpush1.msra.mxu0 0.0
    %462 = vmatprep.subr.mxu0 0.0
    %463 = vmatpush1.msra.mxu0 0.0
    %464 = vmatprep.subr.mxu0 0.0
    %465 = vmatpush1.msra.mxu0 0.0
    %466 = vmatprep.subr.mxu0 0.0
    %467 = vmatpush1.msra.mxu0 0.0
    %468 = vmatprep.subr.mxu0 0.0
    %469 = vmatpush1.msra.mxu0 0.0
    %470 = vmatprep.subr.mxu0 0.0
    %471 = vmatpush1.msra.mxu0 0.0
    %472 = vmatprep.subr.mxu0 0.0
    %473 = vmatpush1.msra.mxu0 0.0
    %474 = vmatprep.subr.mxu0 0.0
    %475 = vmatpush1.msra.mxu0 %v446
    %476 = vmatprep.subr.mxu0 0.0
    %477 = vmatpush1.msra.mxu0 %v445
    %478 = vmatprep.subr.mxu0 0.0
    %479 = vmatpush1.msra.mxu0 %v444
    %480 = vmatprep.subr.mxu0 0.0
    %481 = vmatpush1.msra.mxu0 %v443
    %482 = vmatprep.subr.mxu0 0.0
    %483 = vmatpush2.msra.mxu0 0.0
    %484 = vmatprep.subr.mxu0 0.0
    %485 = vmatpush2.msra.mxu0 0.0
    %486 = vmatprep.subr.mxu0 0.0
    %487 = vmatpush2.msra.mxu0 0.0
    %488 = vmatprep.subr.mxu0 0.0
    %489 = vmatpush2.msra.mxu0 0.0
    %490 = vmatprep.subr.mxu0 0.0
    %491 = vmatpush2.msra.mxu0 0.0
    %492 = vmatprep.subr.mxu0 0.0
    %493 = vmatpush2.msra.mxu0 0.0
    %494 = vmatprep.subr.mxu0 0.0
    %495 = vmatpush2.msra.mxu0 0.0
    %496 = vmatprep.subr.mxu0 0.0
    %497 = vmatpush2.msra.mxu0 0.0
    %498 = vmatprep.subr.mxu0 0.0
    %499 = vmatpush2.msra.mxu0 0.0
    %500 = vmatprep.subr.mxu0 0.0
    %501 = vmatpush2.msra.mxu0 0.0
    %502 = vmatprep.subr.mxu0 0.0
    %503 = vmatpush2.msra.mxu0 0.0
    %504 = vmatprep.subr.mxu0 0.0
    %505 = vmatpush2.msra.mxu0 0.0
    %506 = vmatprep.subr.mxu0 0.0
    %507 = vmatpush2.msra.mxu0 0.0
    %508 = vmatprep.subr.mxu0 0.0
    %509 = vmatpush2.msra.mxu0 0.0
    %510 = vmatprep.subr.mxu0 0.0
    %511 = vmatpush2.msra.mxu0 0.0
    %512 = vmatprep.subr.mxu0 0.0
    %513 = vmatpush2.msra.mxu0 0.0
    %514 = vmatprep.mubr.f32.mxu0 0.0
    %515 = vmatmul.mubr.f32.gmra.mxu0 %v448
    %v516 = vpop.f32.mrf.mxu0
    %v517 = vadd.f32 0.0, %v516
    %v518 = vpop.f32.mrf.mxu0
    %519 = vdwg.mxu0
    %v520 = vadd.f32 %v441, %v517
    %v521 = vmul.f32 %v520, 0.5
    %v522 = vtanh.pop %v521
    %v523 = vmul.f32 %v522, 0.5
    %v524 = vadd.f32 %v523, 0.5
    %v525 = vtanh.pop %v520
    %v526 = vld [vmem:[#allocation3] sm:$0xff]
    %528 = vrot.lane.b32.xlu0 %v526, 32
    %v529 = vpop.permute.xlu0 %528
    %v531 = vmul.f32 %v524, %v529
    %533 = vrot.lane.b32.xlu0 %v525, 32
    %v534 = vpop.permute.xlu0 %533
    %v536 = vmul.f32 %v524, %v534
    %538 = vrot.lane.b32.xlu0 %v536, 32
    %v539 = vpop.permute.xlu0 %538
    %v541 = vadd.f32 %v531, %v539
    %543 = vrot.lane.b32.xlu0 %v541, 96
    %v544 = vpop.permute.xlu0 %543
    %546 = vst.msk [vmem:[#allocation3] sm:$0xff] %vm92, %v544
    %v547 = vtanh.pop %v541
    %549 = vrot.lane.b32.xlu0 %v547, 32
    %v550 = vpop.permute.xlu0 %549
    %v552 = vmul.f32 %v524, %v550
    %554 = vrot.lane.b32.xlu0 %v552, 64
    %v555 = vpop.permute.xlu0 %554
    %557 = vst.msk [vmem:[#allocation2] sm:$0xff] %vm92, %v555
    %s558 = scalar_lea.vmem [#allocation4], 32
    %v559 = vld [vmem:[%s558] sm:$0xff]
    %v560 = vld [vmem:[#allocation2] sm:$0xff]
    %v561 = vld [vmem:[#allocation7] sm:$0xff]
    %v562 = vld [vmem:[#allocation7 + $0x8] sm:$0xff]
    %v563 = vld [vmem:[#allocation7 + $0x10] sm:$0xff]
    %v564 = vld [vmem:[#allocation7 + $0x18] sm:$0xff]
    %v566 = vsel %vm92, %v560, 0
    %568 = vmatprep.subr.mxu0 0.0
    %569 = vmatpush1.msra.mxu0 0.0
    %570 = vmatprep.subr.mxu0 0.0
    %571 = vmatpush1.msra.mxu0 0.0
    %572 = vmatprep.subr.mxu0 0.0
    %573 = vmatpush1.msra.mxu0 0.0
    %574 = vmatprep.subr.mxu0 0.0
    %575 = vmatpush1.msra.mxu0 0.0
    %576 = vmatprep.subr.mxu0 0.0
    %577 = vmatpush1.msra.mxu0 0.0
    %578 = vmatprep.subr.mxu0 0.0
    %579 = vmatpush1.msra.mxu0 0.0
    %580 = vmatprep.subr.mxu0 0.0
    %581 = vmatpush1.msra.mxu0 0.0
    %582 = vmatprep.subr.mxu0 0.0
    %583 = vmatpush1.msra.mxu0 0.0
    %584 = vmatprep.subr.mxu0 0.0
    %585 = vmatpush1.msra.mxu0 0.0
    %586 = vmatprep.subr.mxu0 0.0
    %587 = vmatpush1.msra.mxu0 0.0
    %588 = vmatprep.subr.mxu0 0.0
    %589 = vmatpush1.msra.mxu0 0.0
    %590 = vmatprep.subr.mxu0 0.0
    %591 = vmatpush1.msra.mxu0 0.0
    %592 = vmatprep.subr.mxu0 0.0
    %593 = vmatpush1.msra.mxu0 %v564
    %594 = vmatprep.subr.mxu0 0.0
    %595 = vmatpush1.msra.mxu0 %v563
    %596 = vmatprep.subr.mxu0 0.0
    %597 = vmatpush1.msra.mxu0 %v562
    %598 = vmatprep.subr.mxu0 0.0
    %599 = vmatpush1.msra.mxu0 %v561
    %600 = vmatprep.subr.mxu0 0.0
    %601 = vmatpush2.msra.mxu0 0.0
    %602 = vmatprep.subr.mxu0 0.0
    %603 = vmatpush2.msra.mxu0 0.0
    %604 = vmatprep.subr.mxu0 0.0
    %605 = vmatpush2.msra.mxu0 0.0
    %606 = vmatprep.subr.mxu0 0.0
    %607 = vmatpush2.msra.mxu0 0.0
    %608 = vmatprep.subr.mxu0 0.0
    %609 = vmatpush2.msra.mxu0 0.0
    %610 = vmatprep.subr.mxu0 0.0
    %611 = vmatpush2.msra.mxu0 0.0
    %612 = vmatprep.subr.mxu0 0.0
    %613 = vmatpush2.msra.mxu0 0.0
    %614 = vmatprep.subr.mxu0 0.0
    %615 = vmatpush2.msra.mxu0 0.0
    %616 = vmatprep.subr.mxu0 0.0
    %617 = vmatpush2.msra.mxu0 0.0
    %618 = vmatprep.subr.mxu0 0.0
    %619 = vmatpush2.msra.mxu0 0.0
    %620 = vmatprep.subr.mxu0 0.0
    %621 = vmatpush2.msra.mxu0 0.0
    %622 = vmatprep.subr.mxu0 0.0
    %623 = vmatpush2.msra.mxu0 0.0
    %624 = vmatprep.subr.mxu0 0.0
    %625 = vmatpush2.msra.mxu0 0.0
    %626 = vmatprep.subr.mxu0 0.0
    %627 = vmatpush2.msra.mxu0 0.0
    %628 = vmatprep.subr.mxu0 0.0
    %629 = vmatpush2.msra.mxu0 0.0
    %630 = vmatprep.subr.mxu0 0.0
    %631 = vmatpush2.msra.mxu0 0.0
    %632 = vmatprep.mubr.f32.mxu0 0.0
    %633 = vmatmul.mubr.f32.gmra.mxu0 %v566
    %v634 = vpop.f32.mrf.mxu0
    %v635 = vadd.f32 0.0, %v634
    %v636 = vpop.f32.mrf.mxu0
    %637 = vdwg.mxu0
    %v638 = vadd.f32 %v559, %v635
    %v639 = vmul.f32 %v638, 0.5
    %v640 = vtanh.pop %v639
    %v641 = vmul.f32 %v640, 0.5
    %v642 = vadd.f32 %v641, 0.5
    %v643 = vtanh.pop %v638
    %v644 = vld [vmem:[#allocation3] sm:$0xff]
    %646 = vrot.lane.b32.xlu0 %v644, 32
    %v647 = vpop.permute.xlu0 %646
    %v649 = vmul.f32 %v642, %v647
    %651 = vrot.lane.b32.xlu0 %v643, 32
    %v652 = vpop.permute.xlu0 %651
    %v654 = vmul.f32 %v642, %v652
    %656 = vrot.lane.b32.xlu0 %v654, 32
    %v657 = vpop.permute.xlu0 %656
    %v659 = vadd.f32 %v649, %v657
    %661 = vrot.lane.b32.xlu0 %v659, 96
    %v662 = vpop.permute.xlu0 %661
    %664 = vst.msk [vmem:[#allocation3] sm:$0xff] %vm92, %v662
    %v665 = vtanh.pop %v659
    %667 = vrot.lane.b32.xlu0 %v665, 32
    %v668 = vpop.permute.xlu0 %667
    %v670 = vmul.f32 %v642, %v668
    %672 = vrot.lane.b32.xlu0 %v670, 64
    %v673 = vpop.permute.xlu0 %672
    %675 = vst.msk [vmem:[#allocation2] sm:$0xff] %vm92, %v673
    %s676 = scalar_lea.vmem [#allocation4], 40
    %v677 = vld [vmem:[%s676] sm:$0xff]
    %v678 = vld [vmem:[#allocation2] sm:$0xff]
    %v679 = vld [vmem:[#allocation7] sm:$0xff]
    %v680 = vld [vmem:[#allocation7 + $0x8] sm:$0xff]
    %v681 = vld [vmem:[#allocation7 + $0x10] sm:$0xff]
    %v682 = vld [vmem:[#allocation7 + $0x18] sm:$0xff]
    %v684 = vsel %vm92, %v678, 0
    %686 = vmatprep.subr.mxu0 0.0
    %687 = vmatpush1.msra.mxu0 0.0
    %688 = vmatprep.subr.mxu0 0.0
    %689 = vmatpush1.msra.mxu0 0.0
    %690 = vmatprep.subr.mxu0 0.0
    %691 = vmatpush1.msra.mxu0 0.0
    %692 = vmatprep.subr.mxu0 0.0
    %693 = vmatpush1.msra.mxu0 0.0
    %694 = vmatprep.subr.mxu0 0.0
    %695 = vmatpush1.msra.mxu0 0.0
    %696 = vmatprep.subr.mxu0 0.0
    %697 = vmatpush1.msra.mxu0 0.0
    %698 = vmatprep.subr.mxu0 0.0
    %699 = vmatpush1.msra.mxu0 0.0
    %700 = vmatprep.subr.mxu0 0.0
    %701 = vmatpush1.msra.mxu0 0.0
    %702 = vmatprep.subr.mxu0 0.0
    %703 = vmatpush1.msra.mxu0 0.0
    %704 = vmatprep.subr.mxu0 0.0
    %705 = vmatpush1.msra.mxu0 0.0
    %706 = vmatprep.subr.mxu0 0.0
    %707 = vmatpush1.msra.mxu0 0.0
    %708 = vmatprep.subr.mxu0 0.0
    %709 = vmatpush1.msra.mxu0 0.0
    %710 = vmatprep.subr.mxu0 0.0
    %711 = vmatpush1.msra.mxu0 %v682
    %712 = vmatprep.subr.mxu0 0.0
    %713 = vmatpush1.msra.mxu0 %v681
    %714 = vmatprep.subr.mxu0 0.0
    %715 = vmatpush1.msra.mxu0 %v680
    %716 = vmatprep.subr.mxu0 0.0
    %717 = vmatpush1.msra.mxu0 %v679
    %718 = vmatprep.subr.mxu0 0.0
    %719 = vmatpush2.msra.mxu0 0.0
    %720 = vmatprep.subr.mxu0 0.0
    %721 = vmatpush2.msra.mxu0 0.0
    %722 = vmatprep.subr.mxu0 0.0
    %723 = vmatpush2.msra.mxu0 0.0
    %724 = vmatprep.subr.mxu0 0.0
    %725 = vmatpush2.msra.mxu0 0.0
    %726 = vmatprep.subr.mxu0 0.0
    %727 = vmatpush2.msra.mxu0 0.0
    %728 = vmatprep.subr.mxu0 0.0
    %729 = vmatpush2.msra.mxu0 0.0
    %730 = vmatprep.subr.mxu0 0.0
    %731 = vmatpush2.msra.mxu0 0.0
    %732 = vmatprep.subr.mxu0 0.0
    %733 = vmatpush2.msra.mxu0 0.0
    %734 = vmatprep.subr.mxu0 0.0
    %735 = vmatpush2.msra.mxu0 0.0
    %736 = vmatprep.subr.mxu0 0.0
    %737 = vmatpush2.msra.mxu0 0.0
    %738 = vmatprep.subr.mxu0 0.0
    %739 = vmatpush2.msra.mxu0 0.0
    %740 = vmatprep.subr.mxu0 0.0
    %741 = vmatpush2.msra.mxu0 0.0
    %742 = vmatprep.subr.mxu0 0.0
    %743 = vmatpush2.msra.mxu0 0.0
    %744 = vmatprep.subr.mxu0 0.0
    %745 = vmatpush2.msra.mxu0 0.0
    %746 = vmatprep.subr.mxu0 0.0
    %747 = vmatpush2.msra.mxu0 0.0
    %748 = vmatprep.subr.mxu0 0.0
    %749 = vmatpush2.msra.mxu0 0.0
    %750 = vmatprep.mubr.f32.mxu0 0.0
    %751 = vmatmul.mubr.f32.gmra.mxu0 %v684
    %v752 = vpop.f32.mrf.mxu0
    %v753 = vadd.f32 0.0, %v752
    %v754 = vpop.f32.mrf.mxu0
    %755 = vdwg.mxu0
    %v756 = vadd.f32 %v677, %v753
    %v757 = vmul.f32 %v756, 0.5
    %v758 = vtanh.pop %v757
    %v759 = vmul.f32 %v758, 0.5
    %v760 = vadd.f32 %v759, 0.5
    %v761 = vtanh.pop %v756
    %v762 = vld [vmem:[#allocation3] sm:$0xff]
    %764 = vrot.lane.b32.xlu0 %v762, 32
    %v765 = vpop.permute.xlu0 %764
    %v767 = vmul.f32 %v760, %v765
    %769 = vrot.lane.b32.xlu0 %v761, 32
    %v770 = vpop.permute.xlu0 %769
    %v772 = vmul.f32 %v760, %v770
    %774 = vrot.lane.b32.xlu0 %v772, 32
    %v775 = vpop.permute.xlu0 %774
    %v777 = vadd.f32 %v767, %v775
    %779 = vrot.lane.b32.xlu0 %v777, 96
    %v780 = vpop.permute.xlu0 %779
    %782 = vst.msk [vmem:[#allocation3] sm:$0xff] %vm92, %v780
    %v783 = vtanh.pop %v777
    %785 = vrot.lane.b32.xlu0 %v783, 32
    %v786 = vpop.permute.xlu0 %785
    %v788 = vmul.f32 %v760, %v786
    %790 = vrot.lane.b32.xlu0 %v788, 64
    %v791 = vpop.permute.xlu0 %790
    %793 = vst.msk [vmem:[#allocation2] sm:$0xff] %vm92, %v791
    %s794 = scalar_lea.vmem [#allocation4], 48
    %v795 = vld [vmem:[%s794] sm:$0xff]
    %v796 = vld [vmem:[#allocation2] sm:$0xff]
    %v797 = vld [vmem:[#allocation7] sm:$0xff]
    %v798 = vld [vmem:[#allocation7 + $0x8] sm:$0xff]
    %v799 = vld [vmem:[#allocation7 + $0x10] sm:$0xff]
    %v800 = vld [vmem:[#allocation7 + $0x18] sm:$0xff]
    %v802 = vsel %vm92, %v796, 0
    %804 = vmatprep.subr.mxu0 0.0
    %805 = vmatpush1.msra.mxu0 0.0
    %806 = vmatprep.subr.mxu0 0.0
    %807 = vmatpush1.msra.mxu0 0.0
    %808 = vmatprep.subr.mxu0 0.0
    %809 = vmatpush1.msra.mxu0 0.0
    %810 = vmatprep.subr.mxu0 0.0
    %811 = vmatpush1.msra.mxu0 0.0
    %812 = vmatprep.subr.mxu0 0.0
    %813 = vmatpush1.msra.mxu0 0.0
    %814 = vmatprep.subr.mxu0 0.0
    %815 = vmatpush1.msra.mxu0 0.0
    %816 = vmatprep.subr.mxu0 0.0
    %817 = vmatpush1.msra.mxu0 0.0
    %818 = vmatprep.subr.mxu0 0.0
    %819 = vmatpush1.msra.mxu0 0.0
    %820 = vmatprep.subr.mxu0 0.0
    %821 = vmatpush1.msra.mxu0 0.0
    %822 = vmatprep.subr.mxu0 0.0
    %823 = vmatpush1.msra.mxu0 0.0
    %824 = vmatprep.subr.mxu0 0.0
    %825 = vmatpush1.msra.mxu0 0.0
    %826 = vmatprep.subr.mxu0 0.0
    %827 = vmatpush1.msra.mxu0 0.0
    %828 = vmatprep.subr.mxu0 0.0
    %829 = vmatpush1.msra.mxu0 %v800
    %830 = vmatprep.subr.mxu0 0.0
    %831 = vmatpush1.msra.mxu0 %v799
    %832 = vmatprep.subr.mxu0 0.0
    %833 = vmatpush1.msra.mxu0 %v798
    %834 = vmatprep.subr.mxu0 0.0
    %835 = vmatpush1.msra.mxu0 %v797
    %836 = vmatprep.subr.mxu0 0.0
    %837 = vmatpush2.msra.mxu0 0.0
    %838 = vmatprep.subr.mxu0 0.0
    %839 = vmatpush2.msra.mxu0 0.0
    %840 = vmatprep.subr.mxu0 0.0
    %841 = vmatpush2.msra.mxu0 0.0
    %842 = vmatprep.subr.mxu0 0.0
    %843 = vmatpush2.msra.mxu0 0.0
    %844 = vmatprep.subr.mxu0 0.0
    %845 = vmatpush2.msra.mxu0 0.0
    %846 = vmatprep.subr.mxu0 0.0
    %847 = vmatpush2.msra.mxu0 0.0
    %848 = vmatprep.subr.mxu0 0.0
    %849 = vmatpush2.msra.mxu0 0.0
    %850 = vmatprep.subr.mxu0 0.0
    %851 = vmatpush2.msra.mxu0 0.0
    %852 = vmatprep.subr.mxu0 0.0
    %853 = vmatpush2.msra.mxu0 0.0
    %854 = vmatprep.subr.mxu0 0.0
    %855 = vmatpush2.msra.mxu0 0.0
    %856 = vmatprep.subr.mxu0 0.0
    %857 = vmatpush2.msra.mxu0 0.0
    %858 = vmatprep.subr.mxu0 0.0
    %859 = vmatpush2.msra.mxu0 0.0
    %860 = vmatprep.subr.mxu0 0.0
    %861 = vmatpush2.msra.mxu0 0.0
    %862 = vmatprep.subr.mxu0 0.0
    %863 = vmatpush2.msra.mxu0 0.0
    %864 = vmatprep.subr.mxu0 0.0
    %865 = vmatpush2.msra.mxu0 0.0
    %866 = vmatprep.subr.mxu0 0.0
    %867 = vmatpush2.msra.mxu0 0.0
    %868 = vmatprep.mubr.f32.mxu0 0.0
    %869 = vmatmul.mubr.f32.gmra.mxu0 %v802
    %v870 = vpop.f32.mrf.mxu0
    %v871 = vadd.f32 0.0, %v870
    %v872 = vpop.f32.mrf.mxu0
    %873 = vdwg.mxu0
    %v874 = vadd.f32 %v795, %v871
    %v875 = vmul.f32 %v874, 0.5
    %v876 = vtanh.pop %v875
    %v877 = vmul.f32 %v876, 0.5
    %v878 = vadd.f32 %v877, 0.5
    %v879 = vtanh.pop %v874
    %v880 = vld [vmem:[#allocation3] sm:$0xff]
    %882 = vrot.lane.b32.xlu0 %v880, 32
    %v883 = vpop.permute.xlu0 %882
    %v885 = vmul.f32 %v878, %v883
    %887 = vrot.lane.b32.xlu0 %v879, 32
    %v888 = vpop.permute.xlu0 %887
    %v890 = vmul.f32 %v878, %v888
    %892 = vrot.lane.b32.xlu0 %v890, 32
    %v893 = vpop.permute.xlu0 %892
    %v895 = vadd.f32 %v885, %v893
    %897 = vrot.lane.b32.xlu0 %v895, 96
    %v898 = vpop.permute.xlu0 %897
    %900 = vst.msk [vmem:[#allocation3] sm:$0xff] %vm92, %v898
    %v901 = vtanh.pop %v895
    %903 = vrot.lane.b32.xlu0 %v901, 32
    %v904 = vpop.permute.xlu0 %903
    %v906 = vmul.f32 %v878, %v904
    %908 = vrot.lane.b32.xlu0 %v906, 64
    %v909 = vpop.permute.xlu0 %908
    %911 = vst.msk [vmem:[#allocation2] sm:$0xff] %vm92, %v909
    %s912 = scalar_lea.vmem [#allocation4], 56
    %v913 = vld [vmem:[%s912] sm:$0xff]
    %v914 = vld [vmem:[#allocation2] sm:$0xff]
    %v915 = vld [vmem:[#allocation7] sm:$0xff]
    %v916 = vld [vmem:[#allocation7 + $0x8] sm:$0xff]
    %v917 = vld [vmem:[#allocation7 + $0x10] sm:$0xff]
    %v918 = vld [vmem:[#allocation7 + $0x18] sm:$0xff]
    %v920 = vsel %vm92, %v914, 0
    %922 = vmatprep.subr.mxu0 0.0
    %923 = vmatpush1.msra.mxu0 0.0
    %924 = vmatprep.subr.mxu0 0.0
    %925 = vmatpush1.msra.mxu0 0.0
    %926 = vmatprep.subr.mxu0 0.0
    %927 = vmatpush1.msra.mxu0 0.0
    %928 = vmatprep.subr.mxu0 0.0
    %929 = vmatpush1.msra.mxu0 0.0
    %930 = vmatprep.subr.mxu0 0.0
    %931 = vmatpush1.msra.mxu0 0.0
    %932 = vmatprep.subr.mxu0 0.0
    %933 = vmatpush1.msra.mxu0 0.0
    %934 = vmatprep.subr.mxu0 0.0
    %935 = vmatpush1.msra.mxu0 0.0
    %936 = vmatprep.subr.mxu0 0.0
    %937 = vmatpush1.msra.mxu0 0.0
    %938 = vmatprep.subr.mxu0 0.0
    %939 = vmatpush1.msra.mxu0 0.0
    %940 = vmatprep.subr.mxu0 0.0
    %941 = vmatpush1.msra.mxu0 0.0
    %942 = vmatprep.subr.mxu0 0.0
    %943 = vmatpush1.msra.mxu0 0.0
    %944 = vmatprep.subr.mxu0 0.0
    %945 = vmatpush1.msra.mxu0 0.0
    %946 = vmatprep.subr.mxu0 0.0
    %947 = vmatpush1.msra.mxu0 %v918
    %948 = vmatprep.subr.mxu0 0.0
    %949 = vmatpush1.msra.mxu0 %v917
    %950 = vmatprep.subr.mxu0 0.0
    %951 = vmatpush1.msra.mxu0 %v916
    %952 = vmatprep.subr.mxu0 0.0
    %953 = vmatpush1.msra.mxu0 %v915
    %954 = vmatprep.subr.mxu0 0.0
    %955 = vmatpush2.msra.mxu0 0.0
    %956 = vmatprep.subr.mxu0 0.0
    %957 = vmatpush2.msra.mxu0 0.0
    %958 = vmatprep.subr.mxu0 0.0
    %959 = vmatpush2.msra.mxu0 0.0
    %960 = vmatprep.subr.mxu0 0.0
    %961 = vmatpush2.msra.mxu0 0.0
    %962 = vmatprep.subr.mxu0 0.0
    %963 = vmatpush2.msra.mxu0 0.0
    %964 = vmatprep.subr.mxu0 0.0
    %965 = vmatpush2.msra.mxu0 0.0
    %966 = vmatprep.subr.mxu0 0.0
    %967 = vmatpush2.msra.mxu0 0.0
    %968 = vmatprep.subr.mxu0 0.0
    %969 = vmatpush2.msra.mxu0 0.0
    %970 = vmatprep.subr.mxu0 0.0
    %971 = vmatpush2.msra.mxu0 0.0
    %972 = vmatprep.subr.mxu0 0.0
    %973 = vmatpush2.msra.mxu0 0.0
    %974 = vmatprep.subr.mxu0 0.0
    %975 = vmatpush2.msra.mxu0 0.0
    %976 = vmatprep.subr.mxu0 0.0
    %977 = vmatpush2.msra.mxu0 0.0
    %978 = vmatprep.subr.mxu0 0.0
    %979 = vmatpush2.msra.mxu0 0.0
    %980 = vmatprep.subr.mxu0 0.0
    %981 = vmatpush2.msra.mxu0 0.0
    %982 = vmatprep.subr.mxu0 0.0
    %983 = vmatpush2.msra.mxu0 0.0
    %984 = vmatprep.subr.mxu0 0.0
    %985 = vmatpush2.msra.mxu0 0.0
    %986 = vmatprep.mubr.f32.mxu0 0.0
    %987 = vmatmul.mubr.f32.gmra.mxu0 %v920
    %v988 = vpop.f32.mrf.mxu0
    %v989 = vadd.f32 0.0, %v988
    %v990 = vpop.f32.mrf.mxu0
    %991 = vdwg.mxu0
    %v992 = vadd.f32 %v913, %v989
    %v993 = vmul.f32 %v992, 0.5
    %v994 = vtanh.pop %v993
    %v995 = vmul.f32 %v994, 0.5
    %v996 = vadd.f32 %v995, 0.5
    %v997 = vtanh.pop %v992
    %v998 = vld [vmem:[#allocation3] sm:$0xff]
    %1000 = vrot.lane.b32.xlu0 %v998, 32
    %v1001 = vpop.permute.xlu0 %1000
    %v1003 = vmul.f32 %v996, %v1001
    %1005 = vrot.lane.b32.xlu0 %v997, 32
    %v1006 = vpop.permute.xlu0 %1005
    %v1008 = vmul.f32 %v996, %v1006
    %1010 = vrot.lane.b32.xlu0 %v1008, 32
    %v1011 = vpop.permute.xlu0 %1010
    %v1013 = vadd.f32 %v1003, %v1011
    %1015 = vrot.lane.b32.xlu0 %v1013, 96
    %v1016 = vpop.permute.xlu0 %1015
    %1018 = vst.msk [vmem:[#allocation3] sm:$0xff] %vm92, %v1016
    %v1019 = vtanh.pop %v1013
    %1021 = vrot.lane.b32.xlu0 %v1019, 32
    %v1022 = vpop.permute.xlu0 %1021
    %v1024 = vmul.f32 %v996, %v1022
    %1026 = vrot.lane.b32.xlu0 %v1024, 64
    %v1027 = vpop.permute.xlu0 %1026
    %1029 = vst.msk [vmem:[#allocation2] sm:$0xff] %vm92, %v1027
    // Predicated region
    $region46: #{tpu_custom_call.1} parent=1 // pred_check
      %p1030 = pneg %p79
    $region47: #{tpu_custom_call.1} parent=1 // pred_check_branch
      %1032 = sbr.rel (%p1030) target = $region49
    $region48: #{tpu_custom_call.1} parent=1 // pred_region
      %v1033 = vld [vmem:[#allocation2] sm:$0xff]
      %v1034 = vmax.f32 %v1033, 0.0
      %v1035 = vld [vmem:[#allocation9] sm:$0xff]
      %v1036 = vld [vmem:[#allocation9 + $0x8] sm:$0xff]
      %v1037 = vld [vmem:[#allocation9 + $0x10] sm:$0xff]
      %v1038 = vld [vmem:[#allocation9 + $0x18] sm:$0xff]
      %v1039 = vld [vmem:[%s3] sm:$0x1]
      %v1041 = vlaneseq
      %v1042 = vshrl.u32 %v1041, 7
      %v1043 = vsub.s32 0, %v1042
      %v1044 = vrot.slane %v1039, %v1043
      %v1047 = vsel %vm92, %v1034, 0
      %1049 = vmatprep.subr.mxu0 0.0
      %1050 = vmatpush1.msra.mxu0 0.0
      %1051 = vmatprep.subr.mxu0 0.0
      %1052 = vmatpush1.msra.mxu0 0.0
      %1053 = vmatprep.subr.mxu0 0.0
      %1054 = vmatpush1.msra.mxu0 0.0
      %1055 = vmatprep.subr.mxu0 0.0
      %1056 = vmatpush1.msra.mxu0 0.0
      %1057 = vmatprep.subr.mxu0 0.0
      %1058 = vmatpush1.msra.mxu0 0.0
      %1059 = vmatprep.subr.mxu0 0.0
      %1060 = vmatpush1.msra.mxu0 0.0
      %1061 = vmatprep.subr.mxu0 0.0
      %1062 = vmatpush1.msra.mxu0 0.0
      %1063 = vmatprep.subr.mxu0 0.0
      %1064 = vmatpush1.msra.mxu0 0.0
      %1065 = vmatprep.subr.mxu0 0.0
      %1066 = vmatpush1.msra.mxu0 0.0
      %1067 = vmatprep.subr.mxu0 0.0
      %1068 = vmatpush1.msra.mxu0 0.0
      %1069 = vmatprep.subr.mxu0 0.0
      %1070 = vmatpush1.msra.mxu0 0.0
      %1071 = vmatprep.subr.mxu0 0.0
      %1072 = vmatpush1.msra.mxu0 0.0
      %1073 = vmatprep.subr.mxu0 0.0
      %1074 = vmatpush1.msra.mxu0 %v1038
      %1075 = vmatprep.subr.mxu0 0.0
      %1076 = vmatpush1.msra.mxu0 %v1037
      %1077 = vmatprep.subr.mxu0 0.0
      %1078 = vmatpush1.msra.mxu0 %v1036
      %1079 = vmatprep.subr.mxu0 0.0
      %1080 = vmatpush1.msra.mxu0 %v1035
      %1081 = vmatprep.subr.mxu0 0.0
      %1082 = vmatpush2.msra.mxu0 0.0
      %1083 = vmatprep.subr.mxu0 0.0
      %1084 = vmatpush2.msra.mxu0 0.0
      %1085 = vmatprep.subr.mxu0 0.0
      %1086 = vmatpush2.msra.mxu0 0.0
      %1087 = vmatprep.subr.mxu0 0.0
      %1088 = vmatpush2.msra.mxu0 0.0
      %1089 = vmatprep.subr.mxu0 0.0
      %1090 = vmatpush2.msra.mxu0 0.0
      %1091 = vmatprep.subr.mxu0 0.0
      %1092 = vmatpush2.msra.mxu0 0.0
      %1093 = vmatprep.subr.mxu0 0.0
      %1094 = vmatpush2.msra.mxu0 0.0
      %1095 = vmatprep.subr.mxu0 0.0
      %1096 = vmatpush2.msra.mxu0 0.0
      %1097 = vmatprep.subr.mxu0 0.0
      %1098 = vmatpush2.msra.mxu0 0.0
      %1099 = vmatprep.subr.mxu0 0.0
      %1100 = vmatpush2.msra.mxu0 0.0
      %1101 = vmatprep.subr.mxu0 0.0
      %1102 = vmatpush2.msra.mxu0 0.0
      %1103 = vmatprep.subr.mxu0 0.0
      %1104 = vmatpush2.msra.mxu0 0.0
      %1105 = vmatprep.subr.mxu0 0.0
      %1106 = vmatpush2.msra.mxu0 0.0
      %1107 = vmatprep.subr.mxu0 0.0
      %1108 = vmatpush2.msra.mxu0 0.0
      %1109 = vmatprep.subr.mxu0 0.0
      %1110 = vmatpush2.msra.mxu0 0.0
      %1111 = vmatprep.subr.mxu0 0.0
      %1112 = vmatpush2.msra.mxu0 0.0
      %1113 = vmatprep.mubr.f32.mxu0 0.0
      %1114 = vmatmul.mubr.f32.gmra.mxu0 %v1047
      %v1115 = vpop.f32.mrf.mxu0
      %v1116 = vadd.f32 %v1044, %v1115
      %v1117 = vpop.f32.mrf.mxu0
      %1118 = vdwg.mxu0
      %v1119 = vmax.f32 %v1116, 0.0
      %v1120 = vld [vmem:[#allocation10] sm:$0xff]
      %v1121 = vld [vmem:[#allocation10 + $0x8] sm:$0xff]
      %v1122 = vld [vmem:[#allocation10 + $0x10] sm:$0xff]
      %v1123 = vld [vmem:[#allocation10 + $0x18] sm:$0xff]
      %v1124 = vld [vmem:[#allocation10 + $0x20] sm:$0xff]
      %v1125 = vld [vmem:[#allocation10 + $0x28] sm:$0xff]
      %v1126 = vld [vmem:[#allocation10 + $0x30] sm:$0xff]
      %v1127 = vld [vmem:[#allocation10 + $0x38] sm:$0xff]
      %v1128 = vld [vmem:[#allocation10 + $0x40] sm:$0xff]
      %v1129 = vld [vmem:[#allocation10 + $0x48] sm:$0xff]
      %v1130 = vld [vmem:[#allocation10 + $0x50] sm:$0xff]
      %v1131 = vld [vmem:[#allocation10 + $0x58] sm:$0xff]
      %v1132 = vld [vmem:[#allocation10 + $0x60] sm:$0xff]
      %v1133 = vld [vmem:[#allocation10 + $0x68] sm:$0xff]
      %v1134 = vld [vmem:[#allocation10 + $0x70] sm:$0xff]
      %v1135 = vld [vmem:[#allocation10 + $0x78] sm:$0xff]
      %v1136 = vld [vmem:[%s5] sm:$0x1]
      %v1138 = vlaneseq
      %v1139 = vshrl.u32 %v1138, 7
      %v1140 = vsub.s32 0, %v1139
      %v1141 = vrot.slane %v1136, %v1140
      %1143 = vmatprep.subr.mxu0 0.0
      %1144 = vmatpush1.msra.mxu0 %v1135
      %1145 = vmatprep.subr.mxu0 0.0
      %1146 = vmatpush1.msra.mxu0 %v1134
      %1147 = vmatprep.subr.mxu0 0.0
      %1148 = vmatpush1.msra.mxu0 %v1133
      %1149 = vmatprep.subr.mxu0 0.0
      %1150 = vmatpush1.msra.mxu0 %v1132
      %1151 = vmatprep.subr.mxu0 0.0
      %1152 = vmatpush1.msra.mxu0 %v1131
      %1153 = vmatprep.subr.mxu0 0.0
      %1154 = vmatpush1.msra.mxu0 %v1130
      %1155 = vmatprep.subr.mxu0 0.0
      %1156 = vmatpush1.msra.mxu0 %v1129
      %1157 = vmatprep.subr.mxu0 0.0
      %1158 = vmatpush1.msra.mxu0 %v1128
      %1159 = vmatprep.subr.mxu0 0.0
      %1160 = vmatpush1.msra.mxu0 %v1127
      %1161 = vmatprep.subr.mxu0 0.0
      %1162 = vmatpush1.msra.mxu0 %v1126
      %1163 = vmatprep.subr.mxu0 0.0
      %1164 = vmatpush1.msra.mxu0 %v1125
      %1165 = vmatprep.subr.mxu0 0.0
      %1166 = vmatpush1.msra.mxu0 %v1124
      %1167 = vmatprep.subr.mxu0 0.0
      %1168 = vmatpush1.msra.mxu0 %v1123
      %1169 = vmatprep.subr.mxu0 0.0
      %1170 = vmatpush1.msra.mxu0 %v1122
      %1171 = vmatprep.subr.mxu0 0.0
      %1172 = vmatpush1.msra.mxu0 %v1121
      %1173 = vmatprep.subr.mxu0 0.0
      %1174 = vmatpush1.msra.mxu0 %v1120
      %1175 = vmatprep.subr.mxu0 0.0
      %1176 = vmatpush2.msra.mxu0 0.0
      %1177 = vmatprep.subr.mxu0 0.0
      %1178 = vmatpush2.msra.mxu0 0.0
      %1179 = vmatprep.subr.mxu0 0.0
      %1180 = vmatpush2.msra.mxu0 0.0
      %1181 = vmatprep.subr.mxu0 0.0
      %1182 = vmatpush2.msra.mxu0 0.0
      %1183 = vmatprep.subr.mxu0 0.0
      %1184 = vmatpush2.msra.mxu0 0.0
      %1185 = vmatprep.subr.mxu0 0.0
      %1186 = vmatpush2.msra.mxu0 0.0
      %1187 = vmatprep.subr.mxu0 0.0
      %1188 = vmatpush2.msra.mxu0 0.0
      %1189 = vmatprep.subr.mxu0 0.0
      %1190 = vmatpush2.msra.mxu0 0.0
      %1191 = vmatprep.subr.mxu0 0.0
      %1192 = vmatpush2.msra.mxu0 0.0
      %1193 = vmatprep.subr.mxu0 0.0
      %1194 = vmatpush2.msra.mxu0 0.0
      %1195 = vmatprep.subr.mxu0 0.0
      %1196 = vmatpush2.msra.mxu0 0.0
      %1197 = vmatprep.subr.mxu0 0.0
      %1198 = vmatpush2.msra.mxu0 0.0
      %1199 = vmatprep.subr.mxu0 0.0
      %1200 = vmatpush2.msra.mxu0 0.0
      %1201 = vmatprep.subr.mxu0 0.0
      %1202 = vmatpush2.msra.mxu0 0.0
      %1203 = vmatprep.subr.mxu0 0.0
      %1204 = vmatpush2.msra.mxu0 0.0
      %1205 = vmatprep.subr.mxu0 0.0
      %1206 = vmatpush2.msra.mxu0 0.0
      %1207 = vmatprep.mubr.f32.mxu0 0.0
      %1208 = vmatmul.mubr.f32.gmra.mxu0 %v1119
      %v1209 = vpop.f32.mrf.mxu0
      %v1210 = vadd.f32 %v1141, %v1209
      %v1211 = vpop.f32.mrf.mxu0
      %1212 = vdwg.mxu0
      %1213 = vst [vmem:[#allocation12] sm:$0xff] %v1210
    $region49: #{tpu_custom_call.1} parent=1 // pred_fallthru
      _
    // Predicated region
    $region50: #{tpu_custom_call.1} parent=1 // pred_check
      _
    $region51: #{tpu_custom_call.1} parent=1 // pred_check_branch
      %1215 = sbr.rel (0) target = $region53
    $region52: #{tpu_custom_call.1} parent=1 // pred_region
      %s1217 = ssub.s32 128, 128
      %1218 = vsyncadd [#allocation6], %s1217
      %s1220 = sshll.u32 [#allocation12], 4
      %s1221 = int_to_ptr.vmem [resolvable:$true] %s1220
      %1223 = dma.vmem_to_hbm [thread:$0]  %s1221, 128, %s6, [#allocation6]
    $region53: #{tpu_custom_call.1} parent=1 // pred_fallthru
      _
    // Predicated region
    $region54: #{tpu_custom_call.1} parent=1 // pred_check
      _
    $region55: #{tpu_custom_call.1} parent=1 // pred_check_branch
      %1225 = sbr.rel (0) target = $region57
    $region56: #{tpu_custom_call.1} parent=1 // pred_region
      %1226 = dma.done [#allocation6], 128
    $region57: #{tpu_custom_call.1} parent=1 // pred_fallthru
      _
    %1227 = vsyncpa [#allocation5], 1
    %1228 = vsyncpa [#allocation8], 1
    %1229 = vsyncpa [#allocation11], 1
    %1230 = vsyncpa [#allocation6], 1

</llo_original>
